<compile_context>
chip_gen: v6e
topology: v6e:2x2x1
jax: 0.10.0
libtpu: 0.0.40
codegen_flags: <defaults>
</compile_context>

<pallas_src>
import jax
import jax.numpy as jnp
from jax import lax
from jax.experimental import pallas as pl
from jax.experimental.pallas import tpu as pltpu

BN_EPS = 1e-5


# ----------------------------- Pallas kernel ------------------------------- #
def _decoder_block_kernel(x_ref, a1_ref, b1_ref, a2_ref, as_ref, b2s_ref,
                          out_ref, xpad_ref, h1pad_ref):
    # x_ref    : (Nb, H, W*cin)     bf16  lane-dense concat(x, skip) rows
    # a1_ref   : (3, W*cin, W*cmid) bf16  conv1 banded weights (one per row tap)
    # b1_ref   : (1, W*cmid)        f32   conv1 bias (BN folded), lane-tiled
    # a2_ref   : (3, W*cmid, W*cout) bf16 conv2 banded weights
    # as_ref   : (W*cin, W*cout)    bf16  1x1 shortcut block-diagonal weights
    # b2s_ref  : (1, W*cout)        f32   merged conv2 + shortcut bias, lane-tiled
    # out_ref  : (Nb, H, W*cout)    f32   lane-dense output rows
    # xpad_ref : VMEM (Nb, H+2, W*cin)  bf16  input rows + 1-row zero halo
    # h1pad_ref: VMEM (Nb, H+2, W*cmid) bf16  conv1 activation + 1-row zero halo
    nb, h = x_ref.shape[0], x_ref.shape[1]
    wcin = x_ref.shape[2]
    wcmid = a1_ref.shape[2]
    wcout = a2_ref.shape[2]
    m = nb * h
    f32 = jnp.float32
    bf16 = jnp.bfloat16

    # zero the 1-row top/bottom halos (4 narrow stores; done every step so the
    # kernel is safe under megacore splitting of the "parallel" grid axis)
    xpad_ref[:, 0:1, :] = jnp.zeros((nb, 1, wcin), bf16)
    xpad_ref[:, h + 1:h + 2, :] = jnp.zeros((nb, 1, wcin), bf16)
    h1pad_ref[:, 0:1, :] = jnp.zeros((nb, 1, wcmid), bf16)
    h1pad_ref[:, h + 1:h + 2, :] = jnp.zeros((nb, 1, wcmid), bf16)

    # stage the lane-dense input rows into the row-padded scratch
    xpad_ref[:, 1:h + 1, :] = x_ref[...]

    # ---- conv1 (3x3): one banded matmul per row tap, bf16 operands, f32 acc ----
    acc1 = None
    for ky in range(3):
        rows = xpad_ref[:, ky:ky + h, :].reshape(m, wcin)
        part = jnp.dot(rows, a1_ref[ky], preferred_element_type=f32)
        acc1 = part if acc1 is None else acc1 + part
    h1 = jnp.maximum(acc1 + b1_ref[...], 0.0)                    # (M, W*cmid) f32
    h1pad_ref[:, 1:h + 1, :] = h1.astype(bf16).reshape(nb, h, wcmid)

    # ---- conv2 (3x3) + fused 1x1 shortcut, f32 accumulate ----
    acc2 = jnp.dot(x_ref[...].reshape(m, wcin), as_ref[...],
                   preferred_element_type=f32)                    # shortcut
    for ky in range(3):
        rows = h1pad_ref[:, ky:ky + h, :].reshape(m, wcmid)
        acc2 = acc2 + jnp.dot(rows, a2_ref[ky], preferred_element_type=f32)
    out = jnp.maximum(acc2 + b2s_ref[...], 0.0)                   # (M, W*cout) f32

    # lane-dense store, no relayout: (M, W*cout) -> (Nb, H, W*cout)
    out_ref[...] = out.reshape(nb, h, wcout).astype(out_ref.dtype)


# ------------------------------ JAX wrapper -------------------------------- #
def decoder_basic_block(x_nchw, skip_nchw, kernel_params, *, images_per_step=2):
    """x_nchw: (N, Cx, H, W); skip_nchw: (N, Cs, H, W). Returns (N, Cout, H, W) f32."""
    a1, b1, a2, a_s, b2s = kernel_params
    n, cx, h, w = x_nchw.shape
    cs = skip_nchw.shape[1]
    cin = cx + cs
    wcin = w * cin
    assert a1.shape[0] == 3 and a1.shape[1] == wcin, \
        "banded kernel weights were built for a different W / cin"
    wcmid = a1.shape[2]
    wcout = a2.shape[2]
    cout = wcout // w

    # lane-dense bf16 input slab: concat(x, skip) channels-last, one row = W*cin lanes
    x_nhwc = jnp.transpose(x_nchw, (0, 2, 3, 1))
    s_nhwc = jnp.transpose(skip_nchw, (0, 2, 3, 1))
    x_slab = jnp.concatenate([x_nhwc, s_nhwc], axis=-1).reshape(n, h, wcin)
    x_slab = x_slab.astype(jnp.bfloat16)

    nb = images_per_step if (n % images_per_step == 0) else 1
    grid = (n // nb,)

    flops = 2 * n * h * (3 * wcin * wcmid + 3 * wcmid * wcout + wcin * wcout)
    bytes_accessed = (x_slab.size * 2 + n * h * wcout * 4
                      + (a1.size + a2.size + a_s.size) * 2
                      + (b1.size + b2s.size) * 4)

    out_slab = pl.pallas_call(
        _decoder_block_kernel,
        out_shape=jax.ShapeDtypeStruct((n, h, wcout), jnp.float32),
        grid_spec=pltpu.PrefetchScalarGridSpec(
            num_scalar_prefetch=0,
            grid=grid,
            in_specs=[
                pl.BlockSpec((nb, h, wcin), lambda i: (i, 0, 0)),
                pl.BlockSpec((3, wcin, wcmid), lambda i: (0, 0, 0)),
                pl.BlockSpec((1, wcmid), lambda i: (0, 0)),
                pl.BlockSpec((3, wcmid, wcout), lambda i: (0, 0, 0)),
                pl.BlockSpec((wcin, wcout), lambda i: (0, 0)),
                pl.BlockSpec((1, wcout), lambda i: (0, 0)),
            ],
            out_specs=pl.BlockSpec((nb, h, wcout), lambda i: (i, 0, 0)),
            scratch_shapes=[
                pltpu.VMEM((nb, h + 2, wcin), jnp.bfloat16),
                pltpu.VMEM((nb, h + 2, wcmid), jnp.bfloat16),
            ],
        ),
        compiler_params=pltpu.CompilerParams(dimension_semantics=("parallel",)),
        cost_estimate=pl.CostEstimate(flops=int(flops), transcendentals=0,
                                      bytes_accessed=int(bytes_accessed)),
    )(x_slab, a1, b1, a2, a_s, b2s)

    out = out_slab.reshape(n, h, w, cout)
    return jnp.transpose(out, (0, 3, 1, 2))


# ------------------------- parameter construction -------------------------- #
def _fold_bn(w_hwio, gamma, beta, mean, var, eps=BN_EPS):
    scale = gamma / jnp.sqrt(var + eps)                 # per output channel
    return w_hwio * scale, beta - mean * scale


def init_module_params(key, cin, cmid, cout):
    """Random eval-mode module params: HWIO conv weights with BN folded in."""
    ks = jax.random.split(key, 6)

    def conv_w(k, kh, kw, ci, co):
        fan_in = kh * kw * ci
        return jax.random.normal(k, (kh, kw, ci, co), jnp.float32) / jnp.sqrt(fan_in)

    def bn(k, c):
        k1, k2, k3, k4 = jax.random.split(k, 4)
        gamma = 0.5 + jax.random.uniform(k1, (c,), jnp.float32)
        beta = 0.1 * jax.random.normal(k2, (c,), jnp.float32)
        mean = 0.1 * jax.random.normal(k3, (c,), jnp.float32)
        var = 0.5 + jax.random.uniform(k4, (c,), jnp.float32)
        return gamma, beta, mean, var

    w1, b1 = _fold_bn(conv_w(ks[0], 3, 3, cin, cmid), *bn(ks[1], cmid))
    w2, b2 = _fold_bn(conv_w(ks[2], 3, 3, cmid, cout), *bn(ks[3], cout))
    ws, bs = _fold_bn(conv_w(ks[4], 1, 1, cin, cout), *bn(ks[5], cout))
    return w1, b1, w2, b2, ws, bs


def _banded_conv3x3(w_hwio, w_img, dtype):
    """(3,3,ci,co) HWIO -> (3, W*ci, W*co). A[ky] maps a lane-dense input image row
    (W*ci lanes) to a lane-dense output row (W*co lanes) for row tap ky; the
    width-direction SAME zero padding is folded in as band truncation."""
    kh, kw, ci, co = w_hwio.shape
    mats = []
    for ky in range(kh):
        a = jnp.zeros((w_img * ci, w_img * co), jnp.float32)
        for kx in range(kw):
            shift = jnp.eye(w_img, w_img, k=1 - kx, dtype=jnp.float32)
            a = a + jnp.kron(shift, w_hwio[ky, kx])
        mats.append(a)
    return jnp.stack(mats).astype(dtype)


def prepare_kernel_params(module_params, w_img, mxu_dtype=jnp.bfloat16):
    """Banded lane-dense weights for the Pallas kernel (built for image width w_img)."""
    w1, b1, w2, b2, ws, bs = module_params
    cmid, cout = w1.shape[3], w2.shape[3]
    a1 = _banded_conv3x3(w1, w_img, mxu_dtype)
    a2 = _banded_conv3x3(w2, w_img, mxu_dtype)
    a_s = jnp.kron(jnp.eye(w_img, dtype=jnp.float32), ws[0, 0]).astype(mxu_dtype)
    b1_lane = jnp.tile(b1, w_img).reshape(1, w_img * cmid).astype(jnp.float32)
    b2s_lane = jnp.tile(b2 + bs, w_img).reshape(1, w_img * cout).astype(jnp.float32)
    return a1, b1_lane, a2, a_s, b2s_lane


# ------------------------------ JAX reference ------------------------------- #
def ref_forward_nhwc(xcat, w1, b1, w2, b2, ws, bs):
    dn = ('NHWC', 'HWIO', 'NHWC')
    h = lax.conv_general_dilated(xcat, w1, (1, 1), 'SAME', dimension_numbers=dn) + b1
    h = jnp.maximum(h, 0.0)
    h = lax.conv_general_dilated(h, w2, (1, 1), 'SAME', dimension_numbers=dn) + b2
    s = lax.conv_general_dilated(xcat, ws, (1, 1), 'SAME', dimension_numbers=dn) + bs
    return jnp.maximum(h + s, 0.0)


# ---------------------------------- main ------------------------------------ #
if __name__ == "__main__":
    in_channels, skip_channels, out_channels = 6, 2, 16
    cin = in_channels + skip_channels          # 8  -> W*cin = 128 lanes
    cmid = out_channels                        # bottle_ratio = 1.0 in timm BasicBlock
    N, H, W = 4, 16, 16                        # 2 grid steps x 2 images per step

    key = jax.random.PRNGKey(0)
    kx, ksk, kp = jax.random.split(key, 3)
    x = jax.random.normal(kx, (N, in_channels, H, W), jnp.float32)
    skip = jax.random.normal(ksk, (N, skip_channels, H, W), jnp.float32)

    module_params = init_module_params(kp, cin, cmid, out_channels)
    kernel_params = prepare_kernel_params(module_params, W)

    out = decoder_basic_block(x, skip, kernel_params, images_per_step=2)
    jax.block_until_ready(out)

    # correctness vs a pure-JAX f32 reference (kernel uses bf16 MXU operands,
    # f32 accumulation/epilogue -> loosened tolerance per review)
    xcat = jnp.concatenate([jnp.transpose(x, (0, 2, 3, 1)),
                            jnp.transpose(skip, (0, 2, 3, 1))], axis=-1)
    ref = jnp.transpose(ref_forward_nhwc(xcat, *module_params), (0, 3, 1, 2))
    assert out.shape == (N, out_channels, H, W)
    max_err = float(jnp.max(jnp.abs(out - ref)))
    assert jnp.allclose(out, ref, atol=1e-1, rtol=2e-2), max_err

    print("KERNEL_OK")
</pallas_src>

<mosaic_0001>
module attributes {stable_mosaic.version = 11 : i64} {
  func.func @_decoder_block_kernel(%arg0: i32, %arg1: memref<2x16x128xbf16, #tpu.memory_space<vmem>>, %arg2: memref<3x128x256xbf16, #tpu.memory_space<vmem>>, %arg3: memref<1x256xf32, #tpu.memory_space<vmem>>, %arg4: memref<3x256x256xbf16, #tpu.memory_space<vmem>>, %arg5: memref<128x256xbf16, #tpu.memory_space<vmem>>, %arg6: memref<1x256xf32, #tpu.memory_space<vmem>>, %arg7: memref<2x16x256xf32, #tpu.memory_space<vmem>>, %arg8: memref<2x18x128xbf16, #tpu.memory_space<vmem>>, %arg9: memref<2x18x256xbf16, #tpu.memory_space<vmem>>) attributes {dimension_semantics = [#tpu.dimension_semantics<parallel>], iteration_bounds = array<i64: 2>, scalar_prefetch = 0 : i64, scratch_operands = 2 : i64, tpu.core_type = #tpu.core_type<tc>, window_params = [{transform_indices = @transform_0, window_bounds = array<i64: 2, 16, 128>}, {pipeline_mode = #tpu.pipeline_mode<synchronous>, transform_indices = @transform_1, window_bounds = array<i64: 3, 128, 256>}, {pipeline_mode = #tpu.pipeline_mode<synchronous>, transform_indices = @transform_2, window_bounds = array<i64: 1, 256>}, {pipeline_mode = #tpu.pipeline_mode<synchronous>, transform_indices = @transform_3, window_bounds = array<i64: 3, 256, 256>}, {pipeline_mode = #tpu.pipeline_mode<synchronous>, transform_indices = @transform_4, window_bounds = array<i64: 128, 256>}, {pipeline_mode = #tpu.pipeline_mode<synchronous>, transform_indices = @transform_5, window_bounds = array<i64: 1, 256>}, {transform_indices = @transform_6, window_bounds = array<i64: 2, 16, 256>}]} {
    %cst = arith.constant 0.000000e+00 : bf16
    %0 = vector.broadcast %cst : bf16 to vector<2x1x128xbf16>
    %c0 = arith.constant 0 : index
    %c0_0 = arith.constant 0 : index
    %c0_1 = arith.constant 0 : index
    %1 = vector.load %arg8[%c0, %c0_0, %c0_1] : memref<2x18x128xbf16, #tpu.memory_space<vmem>>, vector<2x1x128xbf16>
    tpu.vector_store %arg8[%c0, %c0_0, %c0_1], %0 {strides = array<i32>} : memref<2x18x128xbf16, #tpu.memory_space<vmem>>, vector<2x1x128xbf16>,
    %cst_2 = arith.constant 0.000000e+00 : bf16
    %2 = vector.broadcast %cst_2 : bf16 to vector<2x1x128xbf16>
    %c0_3 = arith.constant 0 : index
    %c17 = arith.constant 17 : index
    %c0_4 = arith.constant 0 : index
    %3 = vector.load %arg8[%c0_3, %c17, %c0_4] : memref<2x18x128xbf16, #tpu.memory_space<vmem>>, vector<2x1x128xbf16>
    tpu.vector_store %arg8[%c0_3, %c17, %c0_4], %2 {strides = array<i32>} : memref<2x18x128xbf16, #tpu.memory_space<vmem>>, vector<2x1x128xbf16>,
    %cst_5 = arith.constant 0.000000e+00 : bf16
    %4 = vector.broadcast %cst_5 : bf16 to vector<2x1x256xbf16>
    %c0_6 = arith.constant 0 : index
    %c0_7 = arith.constant 0 : index
    %c0_8 = arith.constant 0 : index
    %5 = vector.load %arg9[%c0_6, %c0_7, %c0_8] : memref<2x18x256xbf16, #tpu.memory_space<vmem>>, vector<2x1x256xbf16>
    tpu.vector_store %arg9[%c0_6, %c0_7, %c0_8], %4 {strides = array<i32>} : memref<2x18x256xbf16, #tpu.memory_space<vmem>>, vector<2x1x256xbf16>,
    %cst_9 = arith.constant 0.000000e+00 : bf16
    %6 = vector.broadcast %cst_9 : bf16 to vector<2x1x256xbf16>
    %c0_10 = arith.constant 0 : index
    %c17_11 = arith.constant 17 : index
    %c0_12 = arith.constant 0 : index
    %7 = vector.load %arg9[%c0_10, %c17_11, %c0_12] : memref<2x18x256xbf16, #tpu.memory_space<vmem>>, vector<2x1x256xbf16>
    tpu.vector_store %arg9[%c0_10, %c17_11, %c0_12], %6 {strides = array<i32>} : memref<2x18x256xbf16, #tpu.memory_space<vmem>>, vector<2x1x256xbf16>,
    %c0_13 = arith.constant 0 : index
    %c0_14 = arith.constant 0 : index
    %c0_15 = arith.constant 0 : index
    %8 = vector.load %arg1[%c0_13, %c0_14, %c0_15] : memref<2x16x128xbf16, #tpu.memory_space<vmem>>, vector<2x16x128xbf16>
    %c0_16 = arith.constant 0 : index
    %c1 = arith.constant 1 : index
    %c0_17 = arith.constant 0 : index
    %9 = vector.load %arg8[%c0_16, %c1, %c0_17] : memref<2x18x128xbf16, #tpu.memory_space<vmem>>, vector<2x16x128xbf16>
    tpu.vector_store %arg8[%c0_16, %c1, %c0_17], %8 {strides = array<i32>} : memref<2x18x128xbf16, #tpu.memory_space<vmem>>, vector<2x16x128xbf16>,
    %c0_18 = arith.constant 0 : index
    %c0_19 = arith.constant 0 : index
    %c0_20 = arith.constant 0 : index
    %10 = vector.load %arg8[%c0_18, %c0_19, %c0_20] : memref<2x18x128xbf16, #tpu.memory_space<vmem>>, vector<2x16x128xbf16>
    %11 = vector.shape_cast %10 : vector<2x16x128xbf16> to vector<32x128xbf16>
    %c0_21 = arith.constant 0 : index
    %c0_22 = arith.constant 0 : index
    %c0_23 = arith.constant 0 : index
    %12 = vector.load %arg2[%c0_21, %c0_22, %c0_23] : memref<3x128x256xbf16, #tpu.memory_space<vmem>>, vector<1x128x256xbf16>
    %13 = vector.shape_cast %12 : vector<1x128x256xbf16> to vector<128x256xbf16>
    %cst_24 = arith.constant dense<0.000000e+00> : vector<32x256xf32>
    %14 = tpu.matmul %11, %13, %cst_24 {dimension_numbers = #tpu.dot_dimension_numbers<[1], [0], [0], [1], [0, 0, 1, 1], [], []>} : vector<32x128xbf16>, vector<128x256xbf16>, vector<32x256xf32> -> vector<32x256xf32>
    %c0_25 = arith.constant 0 : index
    %c1_26 = arith.constant 1 : index
    %c0_27 = arith.constant 0 : index
    %15 = vector.load %arg8[%c0_25, %c1_26, %c0_27] : memref<2x18x128xbf16, #tpu.memory_space<vmem>>, vector<2x16x128xbf16>
    %16 = vector.shape_cast %15 : vector<2x16x128xbf16> to vector<32x128xbf16>
    %c1_28 = arith.constant 1 : index
    %c0_29 = arith.constant 0 : index
    %c0_30 = arith.constant 0 : index
    %17 = vector.load %arg2[%c1_28, %c0_29, %c0_30] : memref<3x128x256xbf16, #tpu.memory_space<vmem>>, vector<1x128x256xbf16>
    %18 = vector.shape_cast %17 : vector<1x128x256xbf16> to vector<128x256xbf16>
    %cst_31 = arith.constant dense<0.000000e+00> : vector<32x256xf32>
    %19 = tpu.matmul %16, %18, %cst_31 {dimension_numbers = #tpu.dot_dimension_numbers<[1], [0], [0], [1], [0, 0, 1, 1], [], []>} : vector<32x128xbf16>, vector<128x256xbf16>, vector<32x256xf32> -> vector<32x256xf32>
    %20 = arith.addf %14, %19 : vector<32x256xf32>
    %c0_32 = arith.constant 0 : index
    %c2 = arith.constant 2 : index
    %c0_33 = arith.constant 0 : index
    %21 = vector.load %arg8[%c0_32, %c2, %c0_33] : memref<2x18x128xbf16, #tpu.memory_space<vmem>>, vector<2x16x128xbf16>
    %22 = vector.shape_cast %21 : vector<2x16x128xbf16> to vector<32x128xbf16>
    %c2_34 = arith.constant 2 : index
    %c0_35 = arith.constant 0 : index
    %c0_36 = arith.constant 0 : index
    %23 = vector.load %arg2[%c2_34, %c0_35, %c0_36] : memref<3x128x256xbf16, #tpu.memory_space<vmem>>, vector<1x128x256xbf16>
    %24 = vector.shape_cast %23 : vector<1x128x256xbf16> to vector<128x256xbf16>
    %cst_37 = arith.constant dense<0.000000e+00> : vector<32x256xf32>
    %25 = tpu.matmul %22, %24, %cst_37 {dimension_numbers = #tpu.dot_dimension_numbers<[1], [0], [0], [1], [0, 0, 1, 1], [], []>} : vector<32x128xbf16>, vector<128x256xbf16>, vector<32x256xf32> -> vector<32x256xf32>
    %26 = arith.addf %20, %25 : vector<32x256xf32>
    %c0_38 = arith.constant 0 : index
    %c0_39 = arith.constant 0 : index
    %27 = vector.load %arg3[%c0_38, %c0_39] : memref<1x256xf32, #tpu.memory_space<vmem>>, vector<1x256xf32>
    %28 = vector.broadcast %27 : vector<1x256xf32> to vector<32x256xf32>
    %29 = arith.addf %26, %28 : vector<32x256xf32>
    %cst_40 = arith.constant 0.000000e+00 : f32
    %30 = vector.broadcast %cst_40 : f32 to vector<32x256xf32>
    %31 = arith.maximumf %29, %30 : vector<32x256xf32>
    %32 = arith.truncf %31 : vector<32x256xf32> to vector<32x256xbf16>
    %33 = vector.shape_cast %32 : vector<32x256xbf16> to vector<2x16x256xbf16>
    %c0_41 = arith.constant 0 : index
    %c1_42 = arith.constant 1 : index
    %c0_43 = arith.constant 0 : index
    %34 = vector.load %arg9[%c0_41, %c1_42, %c0_43] : memref<2x18x256xbf16, #tpu.memory_space<vmem>>, vector<2x16x256xbf16>
    tpu.vector_store %arg9[%c0_41, %c1_42, %c0_43], %33 {strides = array<i32>} : memref<2x18x256xbf16, #tpu.memory_space<vmem>>, vector<2x16x256xbf16>,
    %c0_44 = arith.constant 0 : index
    %c0_45 = arith.constant 0 : index
    %c0_46 = arith.constant 0 : index
    %35 = vector.load %arg1[%c0_44, %c0_45, %c0_46] : memref<2x16x128xbf16, #tpu.memory_space<vmem>>, vector<2x16x128xbf16>
    %36 = vector.shape_cast %35 : vector<2x16x128xbf16> to vector<32x128xbf16>
    %c0_47 = arith.constant 0 : index
    %c0_48 = arith.constant 0 : index
    %37 = vector.load %arg5[%c0_47, %c0_48] : memref<128x256xbf16, #tpu.memory_space<vmem>>, vector<128x256xbf16>
    %cst_49 = arith.constant dense<0.000000e+00> : vector<32x256xf32>
    %38 = tpu.matmul %36, %37, %cst_49 {dimension_numbers = #tpu.dot_dimension_numbers<[1], [0], [0], [1], [0, 0, 1, 1], [], []>} : vector<32x128xbf16>, vector<128x256xbf16>, vector<32x256xf32> -> vector<32x256xf32>
    %c0_50 = arith.constant 0 : index
    %c0_51 = arith.constant 0 : index
    %c0_52 = arith.constant 0 : index
    %39 = vector.load %arg9[%c0_50, %c0_51, %c0_52] : memref<2x18x256xbf16, #tpu.memory_space<vmem>>, vector<2x16x256xbf16>
    %40 = vector.shape_cast %39 : vector<2x16x256xbf16> to vector<32x256xbf16>
    %c0_53 = arith.constant 0 : index
    %c0_54 = arith.constant 0 : index
    %c0_55 = arith.constant 0 : index
    %41 = vector.load %arg4[%c0_53, %c0_54, %c0_55] : memref<3x256x256xbf16, #tpu.memory_space<vmem>>, vector<1x256x256xbf16>
    %42 = vector.shape_cast %41 : vector<1x256x256xbf16> to vector<256x256xbf16>
    %cst_56 = arith.constant dense<0.000000e+00> : vector<32x256xf32>
    %43 = tpu.matmul %40, %42, %cst_56 {dimension_numbers = #tpu.dot_dimension_numbers<[1], [0], [0], [1], [0, 0, 1, 1], [], []>} : vector<32x256xbf16>, vector<256x256xbf16>, vector<32x256xf32> -> vector<32x256xf32>
    %44 = arith.addf %38, %43 : vector<32x256xf32>
    %c0_57 = arith.constant 0 : index
    %c1_58 = arith.constant 1 : index
    %c0_59 = arith.constant 0 : index
    %45 = vector.load %arg9[%c0_57, %c1_58, %c0_59] : memref<2x18x256xbf16, #tpu.memory_space<vmem>>, vector<2x16x256xbf16>
    %46 = vector.shape_cast %45 : vector<2x16x256xbf16> to vector<32x256xbf16>
    %c1_60 = arith.constant 1 : index
    %c0_61 = arith.constant 0 : index
    %c0_62 = arith.constant 0 : index
    %47 = vector.load %arg4[%c1_60, %c0_61, %c0_62] : memref<3x256x256xbf16, #tpu.memory_space<vmem>>, vector<1x256x256xbf16>
    %48 = vector.shape_cast %47 : vector<1x256x256xbf16> to vector<256x256xbf16>
    %cst_63 = arith.constant dense<0.000000e+00> : vector<32x256xf32>
    %49 = tpu.matmul %46, %48, %cst_63 {dimension_numbers = #tpu.dot_dimension_numbers<[1], [0], [0], [1], [0, 0, 1, 1], [], []>} : vector<32x256xbf16>, vector<256x256xbf16>, vector<32x256xf32> -> vector<32x256xf32>
    %50 = arith.addf %44, %49 : vector<32x256xf32>
    %c0_64 = arith.constant 0 : index
    %c2_65 = arith.constant 2 : index
    %c0_66 = arith.constant 0 : index
    %51 = vector.load %arg9[%c0_64, %c2_65, %c0_66] : memref<2x18x256xbf16, #tpu.memory_space<vmem>>, vector<2x16x256xbf16>
    %52 = vector.shape_cast %51 : vector<2x16x256xbf16> to vector<32x256xbf16>
    %c2_67 = arith.constant 2 : index
    %c0_68 = arith.constant 0 : index
    %c0_69 = arith.constant 0 : index
    %53 = vector.load %arg4[%c2_67, %c0_68, %c0_69] : memref<3x256x256xbf16, #tpu.memory_space<vmem>>, vector<1x256x256xbf16>
    %54 = vector.shape_cast %53 : vector<1x256x256xbf16> to vector<256x256xbf16>
    %cst_70 = arith.constant dense<0.000000e+00> : vector<32x256xf32>
    %55 = tpu.matmul %52, %54, %cst_70 {dimension_numbers = #tpu.dot_dimension_numbers<[1], [0], [0], [1], [0, 0, 1, 1], [], []>} : vector<32x256xbf16>, vector<256x256xbf16>, vector<32x256xf32> -> vector<32x256xf32>
    %56 = arith.addf %50, %55 : vector<32x256xf32>
    %c0_71 = arith.constant 0 : index
    %c0_72 = arith.constant 0 : index
    %57 = vector.load %arg6[%c0_71, %c0_72] : memref<1x256xf32, #tpu.memory_space<vmem>>, vector<1x256xf32>
    %58 = vector.broadcast %57 : vector<1x256xf32> to vector<32x256xf32>
    %59 = arith.addf %56, %58 : vector<32x256xf32>
    %cst_73 = arith.constant 0.000000e+00 : f32
    %60 = vector.broadcast %cst_73 : f32 to vector<32x256xf32>
    %61 = arith.maximumf %59, %60 : vector<32x256xf32>
    %62 = vector.shape_cast %61 : vector<32x256xf32> to vector<2x16x256xf32>
    %c0_74 = arith.constant 0 : index
    %c0_75 = arith.constant 0 : index
    %c0_76 = arith.constant 0 : index
    %63 = vector.load %arg7[%c0_74, %c0_75, %c0_76] : memref<2x16x256xf32, #tpu.memory_space<vmem>>, vector<2x16x256xf32>
    tpu.vector_store %arg7[%c0_74, %c0_75, %c0_76], %62 {strides = array<i32>} : memref<2x16x256xf32, #tpu.memory_space<vmem>>, vector<2x16x256xf32>,
    return
  }
  func.func @transform_0(%arg0: i32) -> (i32, i32, i32) {
    %c0_i32 = arith.constant 0 : i32
    %c0_i32_0 = arith.constant 0 : i32
    %c0_i32_1 = arith.constant 0 : i32
    return %arg0, %c0_i32, %c0_i32_0 : i32, i32, i32
  }
  func.func @transform_1(%arg0: i32) -> (i32, i32, i32) {
    %c0_i32 = arith.constant 0 : i32
    %c0_i32_0 = arith.constant 0 : i32
    %c0_i32_1 = arith.constant 0 : i32
    %c0_i32_2 = arith.constant 0 : i32
    return %c0_i32, %c0_i32_0, %c0_i32_1 : i32, i32, i32
  }
  func.func @transform_2(%arg0: i32) -> (i32, i32) {
    %c0_i32 = arith.constant 0 : i32
    %c0_i32_0 = arith.constant 0 : i32
    %c0_i32_1 = arith.constant 0 : i32
    return %c0_i32, %c0_i32_0 : i32, i32
  }
  func.func @transform_3(%arg0: i32) -> (i32, i32, i32) {
    %c0_i32 = arith.constant 0 : i32
    %c0_i32_0 = arith.constant 0 : i32
    %c0_i32_1 = arith.constant 0 : i32
    %c0_i32_2 = arith.constant 0 : i32
    return %c0_i32, %c0_i32_0, %c0_i32_1 : i32, i32, i32
  }
  func.func @transform_4(%arg0: i32) -> (i32, i32) {
    %c0_i32 = arith.constant 0 : i32
    %c0_i32_0 = arith.constant 0 : i32
    %c0_i32_1 = arith.constant 0 : i32
    return %c0_i32, %c0_i32_0 : i32, i32
  }
  func.func @transform_5(%arg0: i32) -> (i32, i32) {
    %c0_i32 = arith.constant 0 : i32
    %c0_i32_0 = arith.constant 0 : i32
    %c0_i32_1 = arith.constant 0 : i32
    return %c0_i32, %c0_i32_0 : i32, i32
  }
  func.func @transform_6(%arg0: i32) -> (i32, i32, i32) {
    %c0_i32 = arith.constant 0 : i32
    %c0_i32_0 = arith.constant 0 : i32
    %c0_i32_1 = arith.constant 0 : i32
    return %arg0, %c0_i32, %c0_i32_0 : i32, i32, i32
  }
}

</mosaic_0001>

<llo_original>
// kernel: tpu_custom_call.1
$region0: #{tpu_custom_call.1}
  #allocation0 [shape = 'u32[]', space=smem, size = 0x4, offset = 0x4, fixed_abs, tag = 'smem constant byte address 0x4 - core index']
  #allocation1 [shape = 'u32[144,128]{1,0:T(1,128)}', space=vmem, size = 0x12000, scoped, tag = 'internal scratch']
  #allocation2 [shape = 'bf16[2,18,128]{2,1,0:T(8,128)(2,1)}', space=vmem, size = 0x3000, scoped, tag = 'scratch operand']
  #allocation3 [shape = 'bf16[2,18,256]{2,1,0:T(8,128)(2,1)}', space=vmem, size = 0x6000, scoped, tag = 'scratch operand']
  %s0 = inlined_call_operand.hbm [shape: bf16[4,16,128], index: 0, kind: input, shape index: {}]
  %s1 = inlined_call_operand.hbm [shape: bf16[3,128,256], index: 1, kind: input, shape index: {}]
  %s2 = inlined_call_operand.vmem [shape: f32[1,256], index: 2, kind: input, shape index: {}]
  %s3 = inlined_call_operand.hbm [shape: bf16[3,256,256], index: 3, kind: input, shape index: {}]
  %s4 = inlined_call_operand.hbm [shape: bf16[128,256], index: 4, kind: input, shape index: {}]
  %s5 = inlined_call_operand.vmem [shape: f32[1,256], index: 5, kind: input, shape index: {}]
  %s6 = inlined_call_operand.hbm [shape: f32[4,16,256], index: 6, kind: output, shape index: {}]
  %s7 = sld [smem:[#allocation0]]
  $region73: #{tpu_custom_call.1} parent=0
    _
  %s9 = ssub.s32 1, %s7
  %s10 = scalar_select 0, %s9, %s7
  $region1: #{tpu_custom_call.1} parent=0
    #allocation4 [shape = 'u8[16384]{0}', space=vmem, size = 0x4000, scoped, tag = 'input window, operand 0']
    #allocation5 [shape = 's32[2]{0}', space=sflag, size = 0x8, scoped, tag = 'scoped memory for tpu_custom_call.1']
    #allocation6 [shape = 's32[2]{0}', space=sflag, size = 0x8, scoped, tag = 'scoped memory for tpu_custom_call.1']
    #allocation7 [shape = 'u8[196608]{0}', space=vmem, size = 0x30000, scoped, tag = 'input window, operand 1, single buffered']
    #allocation8 [shape = 's32[1]{0}', space=sflag, size = 0x4, scoped, tag = 'scoped memory for tpu_custom_call.1']
    #allocation9 [shape = 'u8[393216]{0}', space=vmem, size = 0x60000, scoped, tag = 'input window, operand 3, single buffered']
    #allocation10 [shape = 'u8[65536]{0}', space=vmem, size = 0x10000, scoped, tag = 'input window, operand 4, single buffered']
    #allocation11 [shape = 's32[1]{0}', space=sflag, size = 0x4, scoped, tag = 'scoped memory for tpu_custom_call.1']
    #allocation12 [shape = 'u8[65536]{0}', space=vmem, size = 0x10000, scoped, tag = 'output window, operand 0']
    %11 = vsyncpa [#allocation5], 0
    %s12 = scalar_lea.sflag [#allocation5], 1
    %13 = vsyncpa %s12, 0
    %14 = vsyncpa [#allocation8], 0
    %15 = vsyncpa [#allocation11], 0
    %16 = vsyncpa [#allocation6], 0
    %s17 = scalar_lea.sflag [#allocation6], 1
    %18 = vsyncpa %s17, 0
    loop: start=0, step=1, limit=4
    $region2: #{tpu_custom_call.1} parent=1 // loop_pre_header
      _
    $region3: #{tpu_custom_call.1} parent=1 // loop_header
      %s20 = sphi 0, %s24
      %p21 = scmp.ge.s32.totalorder %s20, 4
      %s30 = sphi 0, %s32
      %s33 = sphi 0, %s30
      %s34 = sphi 0, %s33
      %s50 = sphi 0, %s34
      %s54 = sphi 0, %s54
      %s56 = sphi 0, %s54
      %s57 = sphi 0, %s56
      %s71 = sphi 0, %s57
      %s75 = sphi 0, %s75
      %s77 = sphi 0, %s75
      %s78 = sphi 0, %s77
      %s92 = sphi 0, %s78
      %s96 = sphi 0, %s96
      %s98 = sphi 0, %s96
      %s99 = sphi 0, %s98
      %s113 = sphi 0, %s99
      %s117 = sphi 0, %s117
      %s119 = sphi 0, %s117
      %s120 = sphi 0, %s119
      %s134 = sphi 0, %s120
      %s138 = sphi 0, %s138
      %s140 = sphi 0, %s138
      %s141 = sphi 0, %s140
      %s155 = sphi 0, %s141
      %s161 = sphi 0, %s163
      %s164 = sphi 0, %s161
      %s165 = sphi 0, %s164
      %s181 = sphi 0, %s165
    $region4: #{tpu_custom_call.1} parent=1 // loop_header_branch
      %23 = sbr.rel (%p21) target = $region8
    $region5: #{tpu_custom_call.1} parent=1 // loop_body
      %s25 = ssub.s32 %s20, 1
      %s26 = ssub.s32 %s20, 2
      %s27 = sadd.s32 %s20, 1
      %s28 = ssub.s32 %s20, %s27
      %p29 = scmp.eq.s32.totalorder %s28, 0
      %s31 = sadd.s32 %s30, 1
      %s32 = scalar_select %p29, %s30, %s31
      %p35 = pneg %p29
      %p36 = scmp.eq.s32.totalorder %s20, 1
      %p37 = por %p35, %p36
      %p38 = scmp.ne.s32.totalorder %s30, %s33
      %p39 = scmp.eq.s32.totalorder %s20, 0
      %p40 = por %p38, %p39
      %p41 = scmp.ne.s32.totalorder %s30, %s33
      %p42 = scmp.eq.s32.totalorder %s25, 1
      %p43 = por %p41, %p42
      %p44 = scmp.ne.s32.totalorder %s33, %s34
      %p45 = scmp.eq.s32.totalorder %s25, 0
      %p46 = por %p44, %p45
      %p47 = scmp.ne.s32.totalorder %s33, %s34
      %p48 = scmp.eq.s32.totalorder %s26, 1
      %p49 = por %p47, %p48
      %p51 = scmp.ne.s32.totalorder %s34, %s50
      %p52 = scmp.eq.s32.totalorder %s26, 0
      %p53 = por %p51, %p52
      %s55 = sadd.s32 %s54, 1
      %p58 = scmp.eq.s32.totalorder %s20, 1
      %p59 = scmp.ne.s32.totalorder %s54, %s56
      %p60 = scmp.eq.s32.totalorder %s20, 0
      %p61 = por %p59, %p60
      %p62 = scmp.ne.s32.totalorder %s54, %s56
      %p63 = scmp.eq.s32.totalorder %s25, 1
      %p64 = por %p62, %p63
      %p65 = scmp.ne.s32.totalorder %s56, %s57
      %p66 = scmp.eq.s32.totalorder %s25, 0
      %p67 = por %p65, %p66
      %p68 = scmp.ne.s32.totalorder %s56, %s57
      %p69 = scmp.eq.s32.totalorder %s26, 1
      %p70 = por %p68, %p69
      %p72 = scmp.ne.s32.totalorder %s57, %s71
      %p73 = scmp.eq.s32.totalorder %s26, 0
      %p74 = por %p72, %p73
      %s76 = sadd.s32 %s75, 1
      %p79 = scmp.eq.s32.totalorder %s20, 1
      %p80 = scmp.ne.s32.totalorder %s75, %s77
      %p81 = scmp.eq.s32.totalorder %s20, 0
      %p82 = por %p80, %p81
      %p83 = scmp.ne.s32.totalorder %s75, %s77
      %p84 = scmp.eq.s32.totalorder %s25, 1
      %p85 = por %p83, %p84
      %p86 = scmp.ne.s32.totalorder %s77, %s78
      %p87 = scmp.eq.s32.totalorder %s25, 0
      %p88 = por %p86, %p87
      %p89 = scmp.ne.s32.totalorder %s77, %s78
      %p90 = scmp.eq.s32.totalorder %s26, 1
      %p91 = por %p89, %p90
      %p93 = scmp.ne.s32.totalorder %s78, %s92
      %p94 = scmp.eq.s32.totalorder %s26, 0
      %p95 = por %p93, %p94
      %s97 = sadd.s32 %s96, 1
      %p100 = scmp.eq.s32.totalorder %s20, 1
      %p101 = scmp.ne.s32.totalorder %s96, %s98
      %p102 = scmp.eq.s32.totalorder %s20, 0
      %p103 = por %p101, %p102
      %p104 = scmp.ne.s32.totalorder %s96, %s98
      %p105 = scmp.eq.s32.totalorder %s25, 1
      %p106 = por %p104, %p105
      %p107 = scmp.ne.s32.totalorder %s98, %s99
      %p108 = scmp.eq.s32.totalorder %s25, 0
      %p109 = por %p107, %p108
      %p110 = scmp.ne.s32.totalorder %s98, %s99
      %p111 = scmp.eq.s32.totalorder %s26, 1
      %p112 = por %p110, %p111
      %p114 = scmp.ne.s32.totalorder %s99, %s113
      %p115 = scmp.eq.s32.totalorder %s26, 0
      %p116 = por %p114, %p115
      %s118 = sadd.s32 %s117, 1
      %p121 = scmp.eq.s32.totalorder %s20, 1
      %p122 = scmp.ne.s32.totalorder %s117, %s119
      %p123 = scmp.eq.s32.totalorder %s20, 0
      %p124 = por %p122, %p123
      %p125 = scmp.ne.s32.totalorder %s117, %s119
      %p126 = scmp.eq.s32.totalorder %s25, 1
      %p127 = por %p125, %p126
      %p128 = scmp.ne.s32.totalorder %s119, %s120
      %p129 = scmp.eq.s32.totalorder %s25, 0
      %p130 = por %p128, %p129
      %p131 = scmp.ne.s32.totalorder %s119, %s120
      %p132 = scmp.eq.s32.totalorder %s26, 1
      %p133 = por %p131, %p132
      %p135 = scmp.ne.s32.totalorder %s120, %s134
      %p136 = scmp.eq.s32.totalorder %s26, 0
      %p137 = por %p135, %p136
      %s139 = sadd.s32 %s138, 1
      %p142 = scmp.eq.s32.totalorder %s20, 1
      %p143 = scmp.ne.s32.totalorder %s138, %s140
      %p144 = scmp.eq.s32.totalorder %s20, 0
      %p145 = por %p143, %p144
      %p146 = scmp.ne.s32.totalorder %s138, %s140
      %p147 = scmp.eq.s32.totalorder %s25, 1
      %p148 = por %p146, %p147
      %p149 = scmp.ne.s32.totalorder %s140, %s141
      %p150 = scmp.eq.s32.totalorder %s25, 0
      %p151 = por %p149, %p150
      %p152 = scmp.ne.s32.totalorder %s140, %s141
      %p153 = scmp.eq.s32.totalorder %s26, 1
      %p154 = por %p152, %p153
      %p156 = scmp.ne.s32.totalorder %s141, %s155
      %p157 = scmp.eq.s32.totalorder %s26, 0
      %p158 = por %p156, %p157
      %s159 = ssub.s32 %s20, %s27
      %p160 = scmp.eq.s32.totalorder %s159, 0
      %s162 = sadd.s32 %s161, 1
      %s163 = scalar_select %p160, %s161, %s162
      %p166 = pneg %p160
      %p167 = scmp.eq.s32.totalorder %s20, 1
      %p168 = por %p166, %p167
      %p169 = scmp.ne.s32.totalorder %s161, %s164
      %p170 = scmp.eq.s32.totalorder %s20, 0
      %p171 = por %p169, %p170
      %p172 = scmp.ne.s32.totalorder %s161, %s164
      %p173 = scmp.eq.s32.totalorder %s25, 1
      %p174 = por %p172, %p173
      %p175 = scmp.ne.s32.totalorder %s164, %s165
      %p176 = scmp.eq.s32.totalorder %s25, 0
      %p177 = por %p175, %p176
      %p178 = scmp.ne.s32.totalorder %s164, %s165
      %p179 = scmp.eq.s32.totalorder %s26, 1
      %p180 = por %p178, %p179
      %p182 = scmp.ne.s32.totalorder %s165, %s181
      %p183 = scmp.eq.s32.totalorder %s26, 0
      %p184 = por %p182, %p183
      %p185 = scmp.le.s32.totalorder 1, %s20
      %p186 = scmp.lt.s32.totalorder %s20, 3
      %p187 = pnand %p185, %p186
      %p188 = pneg %p187
      // Predicated region
      $region9: #{tpu_custom_call.1} parent=5 // pred_check
        _
      $region10: #{tpu_custom_call.1} parent=5 // pred_check_branch
        %190 = sbr.rel (%p187) target = $region12
      $region11: #{tpu_custom_call.1} parent=5 // pred_region
        %s191 = ssub.s32 %s20, 1
        // Predicated region
        $region13: #{tpu_custom_call.1} parent=11 // pred_check
          %p192 = pneg %p67
        $region14: #{tpu_custom_call.1} parent=11 // pred_check_branch
          %194 = sbr.rel (%p192) target = $region16
        $region15: #{tpu_custom_call.1} parent=11 // pred_region
          %s196 = ssub.s32 6144, 6144
          %197 = vsyncadd [#allocation8], %s196
          %s198 = sshll.u32 [#allocation7], 4
          %s199 = int_to_ptr.vmem [resolvable:$true] %s198
          %204 = dma.hbm_to_vmem [thread:$0]  %s1, 6144, %s199, [#allocation8], 128, 128, 8
        $region16: #{tpu_custom_call.1} parent=11 // pred_fallthru
          _
        // Predicated region
        $region17: #{tpu_custom_call.1} parent=11 // pred_check
          %p205 = pneg %p88
        $region18: #{tpu_custom_call.1} parent=11 // pred_check_branch
          %207 = sbr.rel (%p205) target = $region20
        $region19: #{tpu_custom_call.1} parent=11 // pred_region
          _
        $region20: #{tpu_custom_call.1} parent=11 // pred_fallthru
          _
        // Predicated region
        $region21: #{tpu_custom_call.1} parent=11 // pred_check
          %p208 = pneg %p109
        $region22: #{tpu_custom_call.1} parent=11 // pred_check_branch
          %210 = sbr.rel (%p208) target = $region24
        $region23: #{tpu_custom_call.1} parent=11 // pred_region
          %s212 = ssub.s32 12288, 12288
          %213 = vsyncadd [#allocation8], %s212
          %s214 = sshll.u32 [#allocation9], 4
          %s215 = int_to_ptr.vmem [resolvable:$true] %s214
          %220 = dma.hbm_to_vmem [thread:$0]  %s3, 12288, %s215, [#allocation8], 128, 128, 8
        $region24: #{tpu_custom_call.1} parent=11 // pred_fallthru
          _
        // Predicated region
        $region25: #{tpu_custom_call.1} parent=11 // pred_check
          %p221 = pneg %p130
        $region26: #{tpu_custom_call.1} parent=11 // pred_check_branch
          %223 = sbr.rel (%p221) target = $region28
        $region27: #{tpu_custom_call.1} parent=11 // pred_region
          %s225 = ssub.s32 2048, 2048
          %226 = vsyncadd [#allocation11], %s225
          %s227 = sshll.u32 [#allocation10], 4
          %s228 = int_to_ptr.vmem [resolvable:$true] %s227
          %233 = dma.hbm_to_vmem [thread:$0]  %s4, 2048, %s228, [#allocation11], 128, 128, 8
        $region28: #{tpu_custom_call.1} parent=11 // pred_fallthru
          _
        // Predicated region
        $region29: #{tpu_custom_call.1} parent=11 // pred_check
          %p234 = pneg %p151
        $region30: #{tpu_custom_call.1} parent=11 // pred_check_branch
          %236 = sbr.rel (%p234) target = $region32
        $region31: #{tpu_custom_call.1} parent=11 // pred_region
          _
        $region32: #{tpu_custom_call.1} parent=11 // pred_fallthru
          _
      $region12: #{tpu_custom_call.1} parent=5 // pred_fallthru
        _
      %p237 = scmp.lt.s32.totalorder %s20, 2
      // Predicated region
      $region33: #{tpu_custom_call.1} parent=5 // pred_check
        %p238 = pneg %p237
      $region34: #{tpu_custom_call.1} parent=5 // pred_check_branch
        %240 = sbr.rel (%p238) target = $region36
      $region35: #{tpu_custom_call.1} parent=5 // pred_region
        // Predicated region
        $region37: #{tpu_custom_call.1} parent=35 // pred_check
          %p241 = pneg %p40
        $region38: #{tpu_custom_call.1} parent=35 // pred_check_branch
          %243 = sbr.rel (%p241) target = $region40
        $region39: #{tpu_custom_call.1} parent=35 // pred_region
          %s244 = sand.u32 %s30, 1
          %s245 = scalar_lea.sflag [#allocation5], %s244
          %s246 = sand.u32 %s30, 1
          %s247 = smul.addr %s246, 16
          %s248 = scalar_lea.vmem [#allocation4], %s247
          %s249 = smul.u32 2, %s20
          %s251 = ssub.s32 256, 256
          %252 = vsyncadd %s245, %s251
          %s253 = smul.addr %s249, 2
          %s254 = smul.addr %s253, 64
          %s255 = scalar_lea.hbm %s0, %s254
          %s256 = sshll.u32 %s248, 4
          %s257 = int_to_ptr.vmem [resolvable:$true] %s256
          %262 = dma.hbm_to_vmem [thread:$0]  %s255, 256, %s257, %s245, 64, 64, 4
        $region40: #{tpu_custom_call.1} parent=35 // pred_fallthru
          _
      $region36: #{tpu_custom_call.1} parent=5 // pred_fallthru
        _
      %p263 = scmp.le.s32.totalorder 1, %s20
      %p264 = scmp.lt.s32.totalorder %s20, 3
      %p265 = pnand %p263, %p264
      %p266 = pneg %p265
      // Predicated region
      $region41: #{tpu_custom_call.1} parent=5 // pred_check
        _
      $region42: #{tpu_custom_call.1} parent=5 // pred_check_branch
        %268 = sbr.rel (%p265) target = $region44
      $region43: #{tpu_custom_call.1} parent=5 // pred_region
        %s269 = ssub.s32 %s20, 1
        %s270 = sand.u32 %s33, 1
        %s271 = scalar_lea.sflag [#allocation5], %s270
        %s272 = sand.u32 %s33, 1
        %s273 = smul.addr %s272, 16
        %s274 = scalar_lea.vmem [#allocation4], %s273
        // Predicated region
        $region45: #{tpu_custom_call.1} parent=43 // pred_check
          %p275 = pneg %p46
        $region46: #{tpu_custom_call.1} parent=43 // pred_check_branch
          %277 = sbr.rel (%p275) target = $region48
        $region47: #{tpu_custom_call.1} parent=43 // pred_region
          %278 = dma.done %s271, 256
        $region48: #{tpu_custom_call.1} parent=43 // pred_fallthru
          _
        // Predicated region
        $region49: #{tpu_custom_call.1} parent=43 // pred_check
          %p279 = pneg %p67
        $region50: #{tpu_custom_call.1} parent=43 // pred_check_branch
          %281 = sbr.rel (%p279) target = $region52
        $region51: #{tpu_custom_call.1} parent=43 // pred_region
          %282 = dma.done [#allocation8], 6144
        $region52: #{tpu_custom_call.1} parent=43 // pred_fallthru
          _
        // Predicated region
        $region53: #{tpu_custom_call.1} parent=43 // pred_check
          %p283 = pneg %p109
        $region54: #{tpu_custom_call.1} parent=43 // pred_check_branch
          %285 = sbr.rel (%p283) target = $region56
        $region55: #{tpu_custom_call.1} parent=43 // pred_region
          %286 = dma.done [#allocation8], 12288
        $region56: #{tpu_custom_call.1} parent=43 // pred_fallthru
          _
        // Predicated region
        $region57: #{tpu_custom_call.1} parent=43 // pred_check
          %p287 = pneg %p130
        $region58: #{tpu_custom_call.1} parent=43 // pred_check_branch
          %289 = sbr.rel (%p287) target = $region60
        $region59: #{tpu_custom_call.1} parent=43 // pred_region
          %290 = dma.done [#allocation11], 2048
        $region60: #{tpu_custom_call.1} parent=43 // pred_fallthru
          _
        %s291 = sand.u32 %s33, 1
        %s292 = scalar_lea.sflag [#allocation5], %s291
        %s293 = sand.u32 %s33, 1
        %s294 = smul.addr %s293, 16
        %s295 = scalar_lea.vmem [#allocation4], %s294
        %p296 = pneg %p46
        %p297 = pneg %p43
        %p298 = pneg %p67
        %p299 = pneg %p64
        %p300 = pneg %p88
        %p301 = pneg %p85
        %p302 = pneg %p109
        %p303 = pneg %p106
        %p304 = pneg %p130
        %p305 = pneg %p127
        %p306 = pneg %p151
        %p307 = pneg %p148
        %p308 = pneg %p177
        %p309 = pneg %p174
        %s310 = sand.u32 %s164, 1
        %s311 = scalar_lea.sflag [#allocation6], %s310
        %s312 = sand.u32 %s164, 1
        %s313 = smul.addr %s312, 64
        %s314 = scalar_lea.vmem [#allocation12], %s313
        %s315 = smul.u32 2, %s25
        %s316 = smul.u32 2, %s25
        %vm318 = vcmask 1040384
        %vm319 = vsmask.f32 256
        %vm320 = vmand %vm318, %vm319
        %v321 = vld [vmem:[#allocation2] sm:$0x1]
        %v322 = vsel %vm320, 0, %v321
        %323 = vst [vmem:[#allocation2] sm:$0x1] %v322
        %v324 = vld [vmem:[#allocation2 + $0xc] sm:$0x1]
        %v325 = vsel %vm320, 0, %v324
        %326 = vst [vmem:[#allocation2 + $0xc] sm:$0x1] %v325
        %vm327 = vsmask.f32 7938
        %vm328 = vmand %vm318, %vm327
        %v329 = vld [vmem:[#allocation2 + $0x8] sm:$0x1]
        %v330 = vsel %vm328, 0, %v329
        %331 = vst [vmem:[#allocation2 + $0x8] sm:$0x1] %v330
        %v332 = vld [vmem:[#allocation2 + $0x14] sm:$0x1]
        %v333 = vsel %vm328, 0, %v332
        %334 = vst [vmem:[#allocation2 + $0x14] sm:$0x1] %v333
        %vm335 = vcmask 1044484
        %vm336 = vsmask.f32 4352
        %vm337 = vmand %vm335, %vm336
        %vm338 = vmor %vm337, %vm320
        %v339 = vld [vmem:[#allocation3] sm:$0x11]
        %v340 = vsel %vm338, 0, %v339
        %341 = vst [vmem:[#allocation3] sm:$0x11] %v340
        %v342 = vld [vmem:[#allocation3 + $0x18] sm:$0x11]
        %v343 = vsel %vm338, 0, %v342
        %344 = vst [vmem:[#allocation3 + $0x18] sm:$0x11] %v343
        %vm345 = vsmask.f32 7954
        %vm346 = vmand %vm335, %vm345
        %vm347 = vmor %vm346, %vm328
        %v348 = vld [vmem:[#allocation3 + $0x10] sm:$0x11]
        %v349 = vsel %vm347, 0, %v348
        %350 = vst [vmem:[#allocation3 + $0x10] sm:$0x11] %v349
        %v351 = vld [vmem:[#allocation3 + $0x28] sm:$0x11]
        %v352 = vsel %vm347, 0, %v351
        %353 = vst [vmem:[#allocation3 + $0x28] sm:$0x11] %v352
        %v354 = vld [vmem:[%s274] sm:$0xf]
        %v355 = vld [vmem:[%s274 + $0x4] sm:$0xf]
        %v356 = vld [vmem:[%s274 + $0x8] sm:$0xf]
        %v357 = vld [vmem:[%s274 + $0xc] sm:$0xf]
        %vm358 = vsmask.f32 4368
        %vm359 = vmor %vm319, %vm358
        %v361 = vshrl.u32 %v354, 16
        %v363 = vrot.slane %v361, 7
        %v364 = vshll.u32 %v354, 16
        %v366 = vor.u32 %v363, %v364
        %v367 = vrot.slane %v363, 4
        %v369 = vshrl.u32 %v355, 16
        %v371 = vrot.slane %v369, 7
        %v372 = vshll.u32 %v355, 16
        %v374 = vor.u32 %v371, %v372
        %v375 = vsel %vm359, %v367, %v374
        %v376 = vrot.slane %v371, 4
        %v378 = vshrl.u32 %v356, 16
        %v380 = vrot.slane %v378, 7
        %v381 = vshll.u32 %v356, 16
        %v383 = vor.u32 %v380, %v381
        %v384 = vrot.slane %v380, 4
        %v386 = vshrl.u32 %v357, 16
        %v388 = vrot.slane %v386, 7
        %v389 = vshll.u32 %v357, 16
        %v391 = vor.u32 %v388, %v389
        %v392 = vsel %vm359, %v384, %v391
        %v393 = vrot.slane %v388, 4
        %vm400 = vcmask 1043456
        %vm401 = vmand %vm400, %vm327
        %v402 = vld [vmem:[#allocation2] sm:$0xf]
        %v403 = vsel %vm401, %v366, %v402
        %404 = vst [vmem:[#allocation2] sm:$0xf] %v403
        %405 = vst [vmem:[#allocation2 + $0x4] sm:$0xf] %v375
        %v406 = vld [vmem:[#allocation2 + $0x8] sm:$0x1]
        %v407 = vsel %vm320, %v376, %v406
        %408 = vst [vmem:[#allocation2 + $0x8] sm:$0x1] %v407
        %v409 = vld [vmem:[#allocation2 + $0xc] sm:$0xf]
        %v410 = vsel %vm401, %v383, %v409
        %411 = vst [vmem:[#allocation2 + $0xc] sm:$0xf] %v410
        %412 = vst [vmem:[#allocation2 + $0x10] sm:$0xf] %v392
        %v413 = vld [vmem:[#allocation2 + $0x14] sm:$0x1]
        %v414 = vsel %vm320, %v393, %v413
        %415 = vst [vmem:[#allocation2 + $0x14] sm:$0x1] %v414
        %v416 = vld [vmem:[#allocation2] sm:$0xf]
        %v417 = vld [vmem:[#allocation2 + $0x4] sm:$0xf]
        %v418 = vld [vmem:[#allocation2 + $0xc] sm:$0xf]
        %v419 = vld [vmem:[#allocation2 + $0x10] sm:$0xf]
        %v420 = vld [vmem:[#allocation7] sm:$0xff]
        %v421 = vld [vmem:[#allocation7 + $0x8] sm:$0xff]
        %v422 = vld [vmem:[#allocation7 + $0x10] sm:$0xff]
        %v423 = vld [vmem:[#allocation7 + $0x18] sm:$0xff]
        %v424 = vld [vmem:[#allocation7 + $0x20] sm:$0xff]
        %v425 = vld [vmem:[#allocation7 + $0x28] sm:$0xff]
        %v426 = vld [vmem:[#allocation7 + $0x30] sm:$0xff]
        %v427 = vld [vmem:[#allocation7 + $0x38] sm:$0xff]
        %v428 = vld [vmem:[#allocation7 + $0x40] sm:$0xff]
        %v429 = vld [vmem:[#allocation7 + $0x48] sm:$0xff]
        %v430 = vld [vmem:[#allocation7 + $0x50] sm:$0xff]
        %v431 = vld [vmem:[#allocation7 + $0x58] sm:$0xff]
        %v432 = vld [vmem:[#allocation7 + $0x60] sm:$0xff]
        %v433 = vld [vmem:[#allocation7 + $0x68] sm:$0xff]
        %v434 = vld [vmem:[#allocation7 + $0x70] sm:$0xff]
        %v435 = vld [vmem:[#allocation7 + $0x78] sm:$0xff]
        %v436 = vld [vmem:[#allocation2 + $0x8] sm:$0x1]
        %v437 = vld [vmem:[#allocation2 + $0x14] sm:$0x1]
        %vm438 = vsmask.f32 3328
        %vm439 = vsmask.f32 7440
        %vm440 = vmor %vm438, %vm439
        %v442 = vshrl.u32 %v416, 16
        %v444 = vrot.slane %v442, 4
        %v445 = vshll.u32 %v416, 16
        %v447 = vrot.slane %v445, 5
        %v448 = vor.u32 %v444, %v447
        %v449 = vrot.slane %v448, 4
        %v451 = vshll.u32 %v417, 16
        %v453 = vrot.slane %v451, 5
        %v454 = vsel %vm440, %v449, %v453
        %v455 = vshrl.u32 %v417, 16
        %v457 = vrot.slane %v455, 4
        %v458 = vor.u32 %v457, %v453
        %v459 = vrot.slane %v458, 4
        %v461 = vshll.u32 %v436, 16
        %v463 = vrot.slane %v461, 5
        %v464 = vsel %vm440, %v459, %v463
        %v466 = vshrl.u32 %v418, 16
        %v468 = vrot.slane %v466, 4
        %v469 = vshll.u32 %v418, 16
        %v471 = vrot.slane %v469, 5
        %v472 = vor.u32 %v468, %v471
        %v473 = vrot.slane %v472, 4
        %v475 = vshll.u32 %v419, 16
        %v477 = vrot.slane %v475, 5
        %v478 = vsel %vm440, %v473, %v477
        %v479 = vshrl.u32 %v419, 16
        %v481 = vrot.slane %v479, 4
        %v482 = vor.u32 %v481, %v477
        %v483 = vrot.slane %v482, 4
        %v485 = vshll.u32 %v437, 16
        %v487 = vrot.slane %v485, 5
        %v488 = vsel %vm440, %v483, %v487
        %s489 = scalar_lea.vmem [#allocation7], 128
        %v490 = vld [vmem:[%s489] sm:$0xff]
        %v491 = vld [vmem:[%s489 + $0x8] sm:$0xff]
        %v492 = vld [vmem:[%s489 + $0x10] sm:$0xff]
        %v493 = vld [vmem:[%s489 + $0x18] sm:$0xff]
        %v494 = vld [vmem:[%s489 + $0x20] sm:$0xff]
        %v495 = vld [vmem:[%s489 + $0x28] sm:$0xff]
        %v496 = vld [vmem:[%s489 + $0x30] sm:$0xff]
        %v497 = vld [vmem:[%s489 + $0x38] sm:$0xff]
        %v498 = vld [vmem:[%s489 + $0x40] sm:$0xff]
        %v499 = vld [vmem:[%s489 + $0x48] sm:$0xff]
        %v500 = vld [vmem:[%s489 + $0x50] sm:$0xff]
        %v501 = vld [vmem:[%s489 + $0x58] sm:$0xff]
        %v502 = vld [vmem:[%s489 + $0x60] sm:$0xff]
        %v503 = vld [vmem:[%s489 + $0x68] sm:$0xff]
        %v504 = vld [vmem:[%s489 + $0x70] sm:$0xff]
        %v505 = vld [vmem:[%s489 + $0x78] sm:$0xff]
        %v506 = vunpack.c.l.b16 %v454
        %v507 = vunpack.c.l.b16 %v464
        %v508 = vunpack.c.l.b16 %v478
        %v509 = vunpack.c.l.b16 %v488
        %v510 = vpack.c.b16 %v507, %v506
        %v511 = vpack.c.b16 %v509, %v508
        %v530 = vunpack.c.l.b16 %v490
        %v531 = vunpack.c.h.b16 %v490
        %v532 = vunpack.c.l.b16 %v491
        %v533 = vunpack.c.h.b16 %v491
        %v534 = vunpack.c.l.b16 %v492
        %v535 = vunpack.c.h.b16 %v492
        %v536 = vunpack.c.l.b16 %v493
        %v537 = vunpack.c.h.b16 %v493
        %v538 = vunpack.c.l.b16 %v494
        %v539 = vunpack.c.h.b16 %v494
        %v540 = vunpack.c.l.b16 %v495
        %v541 = vunpack.c.h.b16 %v495
        %v542 = vunpack.c.l.b16 %v496
        %v543 = vunpack.c.h.b16 %v496
        %v544 = vunpack.c.l.b16 %v497
        %v545 = vunpack.c.h.b16 %v497
        %v546 = vunpack.c.l.b16 %v498
        %v547 = vunpack.c.h.b16 %v498
        %v548 = vunpack.c.l.b16 %v499
        %v549 = vunpack.c.h.b16 %v499
        %v550 = vunpack.c.l.b16 %v500
        %v551 = vunpack.c.h.b16 %v500
        %v552 = vunpack.c.l.b16 %v501
        %v553 = vunpack.c.h.b16 %v501
        %v554 = vunpack.c.l.b16 %v502
        %v555 = vunpack.c.h.b16 %v502
        %v556 = vunpack.c.l.b16 %v503
        %v557 = vunpack.c.h.b16 %v503
        %v558 = vunpack.c.l.b16 %v504
        %v559 = vunpack.c.h.b16 %v504
        %v560 = vunpack.c.l.b16 %v505
        %v561 = vunpack.c.h.b16 %v505
        %v562 = vpack.c.b16 %v532, %v530
        %v563 = vpack.c.b16 %v533, %v531
        %v564 = vpack.c.b16 %v536, %v534
        %v565 = vpack.c.b16 %v537, %v535
        %v566 = vpack.c.b16 %v540, %v538
        %v567 = vpack.c.b16 %v541, %v539
        %v568 = vpack.c.b16 %v544, %v542
        %v569 = vpack.c.b16 %v545, %v543
        %v570 = vpack.c.b16 %v548, %v546
        %v571 = vpack.c.b16 %v549, %v547
        %v572 = vpack.c.b16 %v552, %v550
        %v573 = vpack.c.b16 %v553, %v551
        %v574 = vpack.c.b16 %v556, %v554
        %v575 = vpack.c.b16 %v557, %v555
        %v576 = vpack.c.b16 %v560, %v558
        %v577 = vpack.c.b16 %v561, %v559
        %594 = vmatprep.subr.bf16.mxu0 %v577
        %595 = vmatpush1.bf16.msra.mxu0 %v576
        %596 = vmatprep.subr.bf16.mxu0 %v575
        %597 = vmatpush1.bf16.msra.mxu0 %v574
        %598 = vmatprep.subr.bf16.mxu0 %v573
        %599 = vmatpush1.bf16.msra.mxu0 %v572
        %600 = vmatprep.subr.bf16.mxu0 %v571
        %601 = vmatpush1.bf16.msra.mxu0 %v570
        %602 = vmatprep.subr.bf16.mxu0 %v569
        %603 = vmatpush1.bf16.msra.mxu0 %v568
        %604 = vmatprep.subr.bf16.mxu0 %v567
        %605 = vmatpush1.bf16.msra.mxu0 %v566
        %606 = vmatprep.subr.bf16.mxu0 %v565
        %607 = vmatpush1.bf16.msra.mxu0 %v564
        %608 = vmatprep.subr.bf16.mxu0 %v563
        %609 = vmatpush1.bf16.msra.mxu0 %v562
        %610 = vmatprep.subr.bf16.mxu0 0
        %611 = vmatpush2.bf16.msra.mxu0 0
        %612 = vmatprep.subr.bf16.mxu0 0
        %613 = vmatpush2.bf16.msra.mxu0 0
        %614 = vmatprep.subr.bf16.mxu0 0
        %615 = vmatpush2.bf16.msra.mxu0 0
        %616 = vmatprep.subr.bf16.mxu0 0
        %617 = vmatpush2.bf16.msra.mxu0 0
        %618 = vmatprep.subr.bf16.mxu0 0
        %619 = vmatpush2.bf16.msra.mxu0 0
        %620 = vmatprep.subr.bf16.mxu0 0
        %621 = vmatpush2.bf16.msra.mxu0 0
        %622 = vmatprep.subr.bf16.mxu0 0
        %623 = vmatpush2.bf16.msra.mxu0 0
        %624 = vmatprep.subr.bf16.mxu0 0
        %625 = vmatpush2.bf16.msra.mxu0 0
        %626 = vmatprep.mubr.bf16.mxu0 0
        %627 = vmatmul.mubr.bf16.gmra.mxu0 %v510
        %v628 = vpop.f32.mrf.mxu0
        %v629 = vadd.f32 0.0, %v628
        %v630 = vpop.f32.mrf.mxu0
        %v631 = vadd.f32 0.0, %v630
        %v632 = vpop.f32.mrf.mxu0
        %v633 = vadd.f32 0.0, %v632
        %v634 = vpop.f32.mrf.mxu0
        %v635 = vadd.f32 0.0, %v634
        %636 = vmatprep.mubr.bf16.mxu0 0
        %637 = vmatmul.mubr.bf16.gmra.mxu0 %v511
        %v638 = vpop.f32.mrf.mxu0
        %v639 = vadd.f32 0.0, %v638
        %v640 = vpop.f32.mrf.mxu0
        %v641 = vadd.f32 0.0, %v640
        %v642 = vpop.f32.mrf.mxu0
        %v643 = vadd.f32 0.0, %v642
        %v644 = vpop.f32.mrf.mxu0
        %v645 = vadd.f32 0.0, %v644
        %646 = vdwg.mxu0
        %v651 = vunpack.c.l.b16 %v416
        %v652 = vunpack.c.l.b16 %v417
        %v653 = vunpack.c.l.b16 %v418
        %v654 = vunpack.c.l.b16 %v419
        %v655 = vpack.c.b16 %v652, %v651
        %v656 = vpack.c.b16 %v654, %v653
        %v675 = vunpack.c.l.b16 %v420
        %v676 = vunpack.c.h.b16 %v420
        %v677 = vunpack.c.l.b16 %v421
        %v678 = vunpack.c.h.b16 %v421
        %v679 = vunpack.c.l.b16 %v422
        %v680 = vunpack.c.h.b16 %v422
        %v681 = vunpack.c.l.b16 %v423
        %v682 = vunpack.c.h.b16 %v423
        %v683 = vunpack.c.l.b16 %v424
        %v684 = vunpack.c.h.b16 %v424
        %v685 = vunpack.c.l.b16 %v425
        %v686 = vunpack.c.h.b16 %v425
        %v687 = vunpack.c.l.b16 %v426
        %v688 = vunpack.c.h.b16 %v426
        %v689 = vunpack.c.l.b16 %v427
        %v690 = vunpack.c.h.b16 %v427
        %v691 = vunpack.c.l.b16 %v428
        %v692 = vunpack.c.h.b16 %v428
        %v693 = vunpack.c.l.b16 %v429
        %v694 = vunpack.c.h.b16 %v429
        %v695 = vunpack.c.l.b16 %v430
        %v696 = vunpack.c.h.b16 %v430
        %v697 = vunpack.c.l.b16 %v431
        %v698 = vunpack.c.h.b16 %v431
        %v699 = vunpack.c.l.b16 %v432
        %v700 = vunpack.c.h.b16 %v432
        %v701 = vunpack.c.l.b16 %v433
        %v702 = vunpack.c.h.b16 %v433
        %v703 = vunpack.c.l.b16 %v434
        %v704 = vunpack.c.h.b16 %v434
        %v705 = vunpack.c.l.b16 %v435
        %v706 = vunpack.c.h.b16 %v435
        %v707 = vpack.c.b16 %v677, %v675
        %v708 = vpack.c.b16 %v678, %v676
        %v709 = vpack.c.b16 %v681, %v679
        %v710 = vpack.c.b16 %v682, %v680
        %v711 = vpack.c.b16 %v685, %v683
        %v712 = vpack.c.b16 %v686, %v684
        %v713 = vpack.c.b16 %v689, %v687
        %v714 = vpack.c.b16 %v690, %v688
        %v715 = vpack.c.b16 %v693, %v691
        %v716 = vpack.c.b16 %v694, %v692
        %v717 = vpack.c.b16 %v697, %v695
        %v718 = vpack.c.b16 %v698, %v696
        %v719 = vpack.c.b16 %v701, %v699
        %v720 = vpack.c.b16 %v702, %v700
        %v721 = vpack.c.b16 %v705, %v703
        %v722 = vpack.c.b16 %v706, %v704
        %739 = vmatprep.subr.bf16.mxu0 %v722
        %740 = vmatpush1.bf16.msra.mxu0 %v721
        %741 = vmatprep.subr.bf16.mxu0 %v720
        %742 = vmatpush1.bf16.msra.mxu0 %v719
        %743 = vmatprep.subr.bf16.mxu0 %v718
        %744 = vmatpush1.bf16.msra.mxu0 %v717
        %745 = vmatprep.subr.bf16.mxu0 %v716
        %746 = vmatpush1.bf16.msra.mxu0 %v715
        %747 = vmatprep.subr.bf16.mxu0 %v714
        %748 = vmatpush1.bf16.msra.mxu0 %v713
        %749 = vmatprep.subr.bf16.mxu0 %v712
        %750 = vmatpush1.bf16.msra.mxu0 %v711
        %751 = vmatprep.subr.bf16.mxu0 %v710
        %752 = vmatpush1.bf16.msra.mxu0 %v709
        %753 = vmatprep.subr.bf16.mxu0 %v708
        %754 = vmatpush1.bf16.msra.mxu0 %v707
        %755 = vmatprep.subr.bf16.mxu0 0
        %756 = vmatpush2.bf16.msra.mxu0 0
        %757 = vmatprep.subr.bf16.mxu0 0
        %758 = vmatpush2.bf16.msra.mxu0 0
        %759 = vmatprep.subr.bf16.mxu0 0
        %760 = vmatpush2.bf16.msra.mxu0 0
        %761 = vmatprep.subr.bf16.mxu0 0
        %762 = vmatpush2.bf16.msra.mxu0 0
        %763 = vmatprep.subr.bf16.mxu0 0
        %764 = vmatpush2.bf16.msra.mxu0 0
        %765 = vmatprep.subr.bf16.mxu0 0
        %766 = vmatpush2.bf16.msra.mxu0 0
        %767 = vmatprep.subr.bf16.mxu0 0
        %768 = vmatpush2.bf16.msra.mxu0 0
        %769 = vmatprep.subr.bf16.mxu0 0
        %770 = vmatpush2.bf16.msra.mxu0 0
        %771 = vmatprep.mubr.bf16.mxu0 0
        %772 = vmatmul.mubr.bf16.gmra.mxu0 %v655
        %v773 = vpop.f32.mrf.mxu0
        %v774 = vadd.f32 %v629, %v773
        %v775 = vpop.f32.mrf.mxu0
        %v776 = vadd.f32 %v631, %v775
        %v777 = vpop.f32.mrf.mxu0
        %v778 = vadd.f32 %v633, %v777
        %v779 = vpop.f32.mrf.mxu0
        %v780 = vadd.f32 %v635, %v779
        %781 = vmatprep.mubr.bf16.mxu0 0
        %782 = vmatmul.mubr.bf16.gmra.mxu0 %v656
        %v783 = vpop.f32.mrf.mxu0
        %v784 = vadd.f32 %v639, %v783
        %v785 = vpop.f32.mrf.mxu0
        %v786 = vadd.f32 %v641, %v785
        %v787 = vpop.f32.mrf.mxu0
        %v788 = vadd.f32 %v643, %v787
        %v789 = vpop.f32.mrf.mxu0
        %v790 = vadd.f32 %v645, %v789
        %791 = vdwg.mxu0
        %v792 = vld [vmem:[#allocation2] sm:$0xe]
        %v793 = vld [vmem:[#allocation2 + $0xc] sm:$0xe]
        %vm798 = vcmask 1042432
        %vm799 = vcmask 1046532
        %vm800 = vmor %vm798, %vm799
        %v801 = vrot.slane %v792, 5
        %v802 = vrot.slane %v801, 4
        %v803 = vrot.slane %v417, 5
        %v804 = vsel %vm800, %v802, %v803
        %v805 = vrot.slane %v803, 4
        %v806 = vrot.slane %v436, 5
        %v807 = vsel %vm800, %v805, %v806
        %v808 = vrot.slane %v793, 5
        %v809 = vrot.slane %v808, 4
        %v810 = vrot.slane %v419, 5
        %v811 = vsel %vm800, %v809, %v810
        %v812 = vrot.slane %v810, 4
        %v813 = vrot.slane %v437, 5
        %v814 = vsel %vm800, %v812, %v813
        %s815 = scalar_lea.vmem [#allocation7], 256
        %v816 = vld [vmem:[%s815] sm:$0xff]
        %v817 = vld [vmem:[%s815 + $0x8] sm:$0xff]
        %v818 = vld [vmem:[%s815 + $0x10] sm:$0xff]
        %v819 = vld [vmem:[%s815 + $0x18] sm:$0xff]
        %v820 = vld [vmem:[%s815 + $0x20] sm:$0xff]
        %v821 = vld [vmem:[%s815 + $0x28] sm:$0xff]
        %v822 = vld [vmem:[%s815 + $0x30] sm:$0xff]
        %v823 = vld [vmem:[%s815 + $0x38] sm:$0xff]
        %v824 = vld [vmem:[%s815 + $0x40] sm:$0xff]
        %v825 = vld [vmem:[%s815 + $0x48] sm:$0xff]
        %v826 = vld [vmem:[%s815 + $0x50] sm:$0xff]
        %v827 = vld [vmem:[%s815 + $0x58] sm:$0xff]
        %v828 = vld [vmem:[%s815 + $0x60] sm:$0xff]
        %v829 = vld [vmem:[%s815 + $0x68] sm:$0xff]
        %v830 = vld [vmem:[%s815 + $0x70] sm:$0xff]
        %v831 = vld [vmem:[%s815 + $0x78] sm:$0xff]
        %v832 = vunpack.c.l.b16 %v804
        %v833 = vunpack.c.l.b16 %v807
        %v834 = vunpack.c.l.b16 %v811
        %v835 = vunpack.c.l.b16 %v814
        %v836 = vpack.c.b16 %v833, %v832
        %v837 = vpack.c.b16 %v835, %v834
        %v856 = vunpack.c.l.b16 %v816
        %v857 = vunpack.c.h.b16 %v816
        %v858 = vunpack.c.l.b16 %v817
        %v859 = vunpack.c.h.b16 %v817
        %v860 = vunpack.c.l.b16 %v818
        %v861 = vunpack.c.h.b16 %v818
        %v862 = vunpack.c.l.b16 %v819
        %v863 = vunpack.c.h.b16 %v819
        %v864 = vunpack.c.l.b16 %v820
        %v865 = vunpack.c.h.b16 %v820
        %v866 = vunpack.c.l.b16 %v821
        %v867 = vunpack.c.h.b16 %v821
        %v868 = vunpack.c.l.b16 %v822
        %v869 = vunpack.c.h.b16 %v822
        %v870 = vunpack.c.l.b16 %v823
        %v871 = vunpack.c.h.b16 %v823
        %v872 = vunpack.c.l.b16 %v824
        %v873 = vunpack.c.h.b16 %v824
        %v874 = vunpack.c.l.b16 %v825
        %v875 = vunpack.c.h.b16 %v825
        %v876 = vunpack.c.l.b16 %v826
        %v877 = vunpack.c.h.b16 %v826
        %v878 = vunpack.c.l.b16 %v827
        %v879 = vunpack.c.h.b16 %v827
        %v880 = vunpack.c.l.b16 %v828
        %v881 = vunpack.c.h.b16 %v828
        %v882 = vunpack.c.l.b16 %v829
        %v883 = vunpack.c.h.b16 %v829
        %v884 = vunpack.c.l.b16 %v830
        %v885 = vunpack.c.h.b16 %v830
        %v886 = vunpack.c.l.b16 %v831
        %v887 = vunpack.c.h.b16 %v831
        %v888 = vpack.c.b16 %v858, %v856
        %v889 = vpack.c.b16 %v859, %v857
        %v890 = vpack.c.b16 %v862, %v860
        %v891 = vpack.c.b16 %v863, %v861
        %v892 = vpack.c.b16 %v866, %v864
        %v893 = vpack.c.b16 %v867, %v865
        %v894 = vpack.c.b16 %v870, %v868
        %v895 = vpack.c.b16 %v871, %v869
        %v896 = vpack.c.b16 %v874, %v872
        %v897 = vpack.c.b16 %v875, %v873
        %v898 = vpack.c.b16 %v878, %v876
        %v899 = vpack.c.b16 %v879, %v877
        %v900 = vpack.c.b16 %v882, %v880
        %v901 = vpack.c.b16 %v883, %v881
        %v902 = vpack.c.b16 %v886, %v884
        %v903 = vpack.c.b16 %v887, %v885
        %920 = vmatprep.subr.bf16.mxu0 %v903
        %921 = vmatpush1.bf16.msra.mxu0 %v902
        %922 = vmatprep.subr.bf16.mxu0 %v901
        %923 = vmatpush1.bf16.msra.mxu0 %v900
        %924 = vmatprep.subr.bf16.mxu0 %v899
        %925 = vmatpush1.bf16.msra.mxu0 %v898
        %926 = vmatprep.subr.bf16.mxu0 %v897
        %927 = vmatpush1.bf16.msra.mxu0 %v896
        %928 = vmatprep.subr.bf16.mxu0 %v895
        %929 = vmatpush1.bf16.msra.mxu0 %v894
        %930 = vmatprep.subr.bf16.mxu0 %v893
        %931 = vmatpush1.bf16.msra.mxu0 %v892
        %932 = vmatprep.subr.bf16.mxu0 %v891
        %933 = vmatpush1.bf16.msra.mxu0 %v890
        %934 = vmatprep.subr.bf16.mxu0 %v889
        %935 = vmatpush1.bf16.msra.mxu0 %v888
        %936 = vmatprep.subr.bf16.mxu0 0
        %937 = vmatpush2.bf16.msra.mxu0 0
        %938 = vmatprep.subr.bf16.mxu0 0
        %939 = vmatpush2.bf16.msra.mxu0 0
        %940 = vmatprep.subr.bf16.mxu0 0
        %941 = vmatpush2.bf16.msra.mxu0 0
        %942 = vmatprep.subr.bf16.mxu0 0
        %943 = vmatpush2.bf16.msra.mxu0 0
        %944 = vmatprep.subr.bf16.mxu0 0
        %945 = vmatpush2.bf16.msra.mxu0 0
        %946 = vmatprep.subr.bf16.mxu0 0
        %947 = vmatpush2.bf16.msra.mxu0 0
        %948 = vmatprep.subr.bf16.mxu0 0
        %949 = vmatpush2.bf16.msra.mxu0 0
        %950 = vmatprep.subr.bf16.mxu0 0
        %951 = vmatpush2.bf16.msra.mxu0 0
        %952 = vmatprep.mubr.bf16.mxu0 0
        %953 = vmatmul.mubr.bf16.gmra.mxu0 %v836
        %v954 = vpop.f32.mrf.mxu0
        %v955 = vadd.f32 0.0, %v954
        %v956 = vpop.f32.mrf.mxu0
        %v957 = vadd.f32 0.0, %v956
        %v958 = vpop.f32.mrf.mxu0
        %v959 = vadd.f32 0.0, %v958
        %v960 = vpop.f32.mrf.mxu0
        %v961 = vadd.f32 0.0, %v960
        %962 = vmatprep.mubr.bf16.mxu0 0
        %963 = vmatmul.mubr.bf16.gmra.mxu0 %v837
        %v964 = vpop.f32.mrf.mxu0
        %v965 = vadd.f32 0.0, %v964
        %v966 = vpop.f32.mrf.mxu0
        %v967 = vadd.f32 0.0, %v966
        %v968 = vpop.f32.mrf.mxu0
        %v969 = vadd.f32 0.0, %v968
        %v970 = vpop.f32.mrf.mxu0
        %v971 = vadd.f32 0.0, %v970
        %972 = vdwg.mxu0
        %v973 = vadd.f32 %v774, %v955
        %v974 = vadd.f32 %v776, %v957
        %v975 = vadd.f32 %v778, %v959
        %v976 = vadd.f32 %v780, %v961
        %v977 = vadd.f32 %v784, %v965
        %v978 = vadd.f32 %v786, %v967
        %v979 = vadd.f32 %v788, %v969
        %v980 = vadd.f32 %v790, %v971
        %v981 = vld [vmem:[%s2] sm:$0x3]
        %v983 = vlaneseq
        %v984 = vshrl.u32 %v983, 7
        %v985 = vsub.s32 0, %v984
        %v986 = vrot.slane %v981, %v985
        %v987 = vlaneseq
        %v988 = vshrl.u32 %v987, 7
        %v989 = vsub.s32 1, %v988
        %v990 = vrot.slane %v981, %v989
        %v993 = vadd.f32 %v973, %v986
        %v994 = vadd.f32 %v974, %v990
        %v995 = vadd.f32 %v975, %v986
        %v996 = vadd.f32 %v976, %v990
        %v997 = vadd.f32 %v977, %v986
        %v998 = vadd.f32 %v978, %v990
        %v999 = vadd.f32 %v979, %v986
        %v1000 = vadd.f32 %v980, %v990
        %v1001 = vmax.f32 %v993, 0.0
        %v1002 = vmax.f32 %v994, 0.0
        %v1003 = vmax.f32 %v995, 0.0
        %v1004 = vmax.f32 %v996, 0.0
        %v1005 = vmax.f32 %v997, 0.0
        %v1006 = vmax.f32 %v998, 0.0
        %v1007 = vmax.f32 %v999, 0.0
        %v1008 = vmax.f32 %v1000, 0.0
        %v1009 = vpack.c.bf16 %v1003, %v1001
        %v1010 = vpack.c.bf16 %v1004, %v1002
        %v1011 = vpack.c.bf16 %v1007, %v1005
        %v1012 = vpack.c.bf16 %v1008, %v1006
        %v1017 = vunpack.c.l.b16 %v1009
        %v1018 = vunpack.c.l.b16 %v1010
        %v1019 = vunpack.c.h.b16 %v1009
        %v1020 = vunpack.c.h.b16 %v1010
        %v1021 = vunpack.c.l.b16 %v1011
        %v1022 = vunpack.c.l.b16 %v1012
        %v1023 = vunpack.c.h.b16 %v1011
        %v1024 = vunpack.c.h.b16 %v1012
        %v1025 = vpack.c.b16 %v1018, %v1017
        %v1026 = vpack.c.b16 %v1020, %v1019
        %v1027 = vpack.c.b16 %v1022, %v1021
        %v1028 = vpack.c.b16 %v1024, %v1023
        %v1030 = vshrl.u32 %v1025, 16
        %v1032 = vrot.slane %v1030, 7
        %v1033 = vshll.u32 %v1025, 16
        %v1035 = vor.u32 %v1032, %v1033
        %v1036 = vrot.slane %v1032, 4
        %v1038 = vshrl.u32 %v1026, 16
        %v1040 = vrot.slane %v1038, 7
        %v1041 = vshll.u32 %v1026, 16
        %v1043 = vor.u32 %v1040, %v1041
        %v1044 = vsel %vm359, %v1036, %v1043
        %v1045 = vrot.slane %v1040, 4
        %v1047 = vshrl.u32 %v1027, 16
        %v1049 = vrot.slane %v1047, 7
        %v1050 = vshll.u32 %v1027, 16
        %v1052 = vor.u32 %v1049, %v1050
        %v1053 = vrot.slane %v1049, 4
        %v1055 = vshrl.u32 %v1028, 16
        %v1057 = vrot.slane %v1055, 7
        %v1058 = vshll.u32 %v1028, 16
        %v1060 = vor.u32 %v1057, %v1058
        %v1061 = vsel %vm359, %v1053, %v1060
        %v1062 = vrot.slane %v1057, 4
        %vm1069 = vcmask 1047556
        %vm1070 = vmand %vm1069, %vm345
        %vm1071 = vmor %vm1070, %vm401
        %v1072 = vld [vmem:[#allocation3] sm:$0xff]
        %v1073 = vsel %vm1071, %v1035, %v1072
        %1074 = vst [vmem:[#allocation3] sm:$0xff] %v1073
        %1075 = vst [vmem:[#allocation3 + $0x8] sm:$0xff] %v1044
        %v1076 = vld [vmem:[#allocation3 + $0x10] sm:$0x11]
        %v1077 = vsel %vm338, %v1045, %v1076
        %1078 = vst [vmem:[#allocation3 + $0x10] sm:$0x11] %v1077
        %v1079 = vld [vmem:[#allocation3 + $0x18] sm:$0xff]
        %v1080 = vsel %vm1071, %v1052, %v1079
        %1081 = vst [vmem:[#allocation3 + $0x18] sm:$0xff] %v1080
        %1082 = vst [vmem:[#allocation3 + $0x20] sm:$0xff] %v1061
        %v1083 = vld [vmem:[#allocation3 + $0x28] sm:$0x11]
        %v1084 = vsel %vm338, %v1062, %v1083
        %1085 = vst [vmem:[#allocation3 + $0x28] sm:$0x11] %v1084
        %v1086 = vld [vmem:[%s274] sm:$0xf]
        %v1087 = vld [vmem:[%s274 + $0x4] sm:$0xf]
        %v1088 = vld [vmem:[%s274 + $0x8] sm:$0xf]
        %v1089 = vld [vmem:[%s274 + $0xc] sm:$0xf]
        %v1090 = vld [vmem:[#allocation10] sm:$0xff]
        %v1091 = vld [vmem:[#allocation10 + $0x8] sm:$0xff]
        %v1092 = vld [vmem:[#allocation10 + $0x10] sm:$0xff]
        %v1093 = vld [vmem:[#allocation10 + $0x18] sm:$0xff]
        %v1094 = vld [vmem:[#allocation10 + $0x20] sm:$0xff]
        %v1095 = vld [vmem:[#allocation10 + $0x28] sm:$0xff]
        %v1096 = vld [vmem:[#allocation10 + $0x30] sm:$0xff]
        %v1097 = vld [vmem:[#allocation10 + $0x38] sm:$0xff]
        %v1098 = vld [vmem:[#allocation10 + $0x40] sm:$0xff]
        %v1099 = vld [vmem:[#allocation10 + $0x48] sm:$0xff]
        %v1100 = vld [vmem:[#allocation10 + $0x50] sm:$0xff]
        %v1101 = vld [vmem:[#allocation10 + $0x58] sm:$0xff]
        %v1102 = vld [vmem:[#allocation10 + $0x60] sm:$0xff]
        %v1103 = vld [vmem:[#allocation10 + $0x68] sm:$0xff]
        %v1104 = vld [vmem:[#allocation10 + $0x70] sm:$0xff]
        %v1105 = vld [vmem:[#allocation10 + $0x78] sm:$0xff]
        %v1106 = vld [vmem:[#allocation3] sm:$0xff]
        %v1107 = vld [vmem:[#allocation3 + $0x8] sm:$0xff]
        %v1108 = vld [vmem:[#allocation3 + $0x18] sm:$0xff]
        %v1109 = vld [vmem:[#allocation3 + $0x20] sm:$0xff]
        %v1110 = vld [vmem:[#allocation9] sm:$0xff]
        %v1111 = vld [vmem:[#allocation9 + $0x8] sm:$0xff]
        %v1112 = vld [vmem:[#allocation9 + $0x10] sm:$0xff]
        %v1113 = vld [vmem:[#allocation9 + $0x18] sm:$0xff]
        %v1114 = vld [vmem:[#allocation9 + $0x20] sm:$0xff]
        %v1115 = vld [vmem:[#allocation9 + $0x28] sm:$0xff]
        %v1116 = vld [vmem:[#allocation9 + $0x30] sm:$0xff]
        %v1117 = vld [vmem:[#allocation9 + $0x38] sm:$0xff]
        %v1118 = vld [vmem:[#allocation9 + $0x40] sm:$0xff]
        %v1119 = vld [vmem:[#allocation9 + $0x48] sm:$0xff]
        %v1120 = vld [vmem:[#allocation9 + $0x50] sm:$0xff]
        %v1121 = vld [vmem:[#allocation9 + $0x58] sm:$0xff]
        %v1122 = vld [vmem:[#allocation9 + $0x60] sm:$0xff]
        %v1123 = vld [vmem:[#allocation9 + $0x68] sm:$0xff]
        %v1124 = vld [vmem:[#allocation9 + $0x70] sm:$0xff]
        %v1125 = vld [vmem:[#allocation9 + $0x78] sm:$0xff]
        %v1126 = vld [vmem:[#allocation9 + $0x80] sm:$0xff]
        %v1127 = vld [vmem:[#allocation9 + $0x88] sm:$0xff]
        %v1128 = vld [vmem:[#allocation9 + $0x90] sm:$0xff]
        %v1129 = vld [vmem:[#allocation9 + $0x98] sm:$0xff]
        %v1130 = vld [vmem:[#allocation9 + $0xa0] sm:$0xff]
        %v1131 = vld [vmem:[#allocation9 + $0xa8] sm:$0xff]
        %v1132 = vld [vmem:[#allocation9 + $0xb0] sm:$0xff]
        %v1133 = vld [vmem:[#allocation9 + $0xb8] sm:$0xff]
        %v1134 = vld [vmem:[#allocation9 + $0xc0] sm:$0xff]
        %v1135 = vld [vmem:[#allocation9 + $0xc8] sm:$0xff]
        %v1136 = vld [vmem:[#allocation9 + $0xd0] sm:$0xff]
        %v1137 = vld [vmem:[#allocation9 + $0xd8] sm:$0xff]
        %v1138 = vld [vmem:[#allocation9 + $0xe0] sm:$0xff]
        %v1139 = vld [vmem:[#allocation9 + $0xe8] sm:$0xff]
        %v1140 = vld [vmem:[#allocation9 + $0xf0] sm:$0xff]
        %v1141 = vld [vmem:[#allocation9 + $0xf8] sm:$0xff]
        %v1146 = vunpack.c.l.b16 %v1106
        %v1147 = vunpack.c.h.b16 %v1106
        %v1148 = vunpack.c.l.b16 %v1107
        %v1149 = vunpack.c.h.b16 %v1107
        %v1150 = vunpack.c.l.b16 %v1108
        %v1151 = vunpack.c.h.b16 %v1108
        %v1152 = vunpack.c.l.b16 %v1109
        %v1153 = vunpack.c.h.b16 %v1109
        %v1154 = vpack.c.b16 %v1148, %v1146
        %v1155 = vpack.c.b16 %v1149, %v1147
        %v1156 = vpack.c.b16 %v1152, %v1150
        %v1157 = vpack.c.b16 %v1153, %v1151
        %v1194 = vunpack.c.l.b16 %v1110
        %v1195 = vunpack.c.h.b16 %v1110
        %v1196 = vunpack.c.l.b16 %v1111
        %v1197 = vunpack.c.h.b16 %v1111
        %v1198 = vunpack.c.l.b16 %v1112
        %v1199 = vunpack.c.h.b16 %v1112
        %v1200 = vunpack.c.l.b16 %v1113
        %v1201 = vunpack.c.h.b16 %v1113
        %v1202 = vunpack.c.l.b16 %v1114
        %v1203 = vunpack.c.h.b16 %v1114
        %v1204 = vunpack.c.l.b16 %v1115
        %v1205 = vunpack.c.h.b16 %v1115
        %v1206 = vunpack.c.l.b16 %v1116
        %v1207 = vunpack.c.h.b16 %v1116
        %v1208 = vunpack.c.l.b16 %v1117
        %v1209 = vunpack.c.h.b16 %v1117
        %v1210 = vunpack.c.l.b16 %v1118
        %v1211 = vunpack.c.h.b16 %v1118
        %v1212 = vunpack.c.l.b16 %v1119
        %v1213 = vunpack.c.h.b16 %v1119
        %v1214 = vunpack.c.l.b16 %v1120
        %v1215 = vunpack.c.h.b16 %v1120
        %v1216 = vunpack.c.l.b16 %v1121
        %v1217 = vunpack.c.h.b16 %v1121
        %v1218 = vunpack.c.l.b16 %v1122
        %v1219 = vunpack.c.h.b16 %v1122
        %v1220 = vunpack.c.l.b16 %v1123
        %v1221 = vunpack.c.h.b16 %v1123
        %v1222 = vunpack.c.l.b16 %v1124
        %v1223 = vunpack.c.h.b16 %v1124
        %v1224 = vunpack.c.l.b16 %v1125
        %v1225 = vunpack.c.h.b16 %v1125
        %v1226 = vunpack.c.l.b16 %v1126
        %v1227 = vunpack.c.h.b16 %v1126
        %v1228 = vunpack.c.l.b16 %v1127
        %v1229 = vunpack.c.h.b16 %v1127
        %v1230 = vunpack.c.l.b16 %v1128
        %v1231 = vunpack.c.h.b16 %v1128
        %v1232 = vunpack.c.l.b16 %v1129
        %v1233 = vunpack.c.h.b16 %v1129
        %v1234 = vunpack.c.l.b16 %v1130
        %v1235 = vunpack.c.h.b16 %v1130
        %v1236 = vunpack.c.l.b16 %v1131
        %v1237 = vunpack.c.h.b16 %v1131
        %v1238 = vunpack.c.l.b16 %v1132
        %v1239 = vunpack.c.h.b16 %v1132
        %v1240 = vunpack.c.l.b16 %v1133
        %v1241 = vunpack.c.h.b16 %v1133
        %v1242 = vunpack.c.l.b16 %v1134
        %v1243 = vunpack.c.h.b16 %v1134
        %v1244 = vunpack.c.l.b16 %v1135
        %v1245 = vunpack.c.h.b16 %v1135
        %v1246 = vunpack.c.l.b16 %v1136
        %v1247 = vunpack.c.h.b16 %v1136
        %v1248 = vunpack.c.l.b16 %v1137
        %v1249 = vunpack.c.h.b16 %v1137
        %v1250 = vunpack.c.l.b16 %v1138
        %v1251 = vunpack.c.h.b16 %v1138
        %v1252 = vunpack.c.l.b16 %v1139
        %v1253 = vunpack.c.h.b16 %v1139
        %v1254 = vunpack.c.l.b16 %v1140
        %v1255 = vunpack.c.h.b16 %v1140
        %v1256 = vunpack.c.l.b16 %v1141
        %v1257 = vunpack.c.h.b16 %v1141
        %v1258 = vpack.c.b16 %v1196, %v1194
        %v1259 = vpack.c.b16 %v1197, %v1195
        %v1260 = vpack.c.b16 %v1200, %v1198
        %v1261 = vpack.c.b16 %v1201, %v1199
        %v1262 = vpack.c.b16 %v1204, %v1202
        %v1263 = vpack.c.b16 %v1205, %v1203
        %v1264 = vpack.c.b16 %v1208, %v1206
        %v1265 = vpack.c.b16 %v1209, %v1207
        %v1266 = vpack.c.b16 %v1212, %v1210
        %v1267 = vpack.c.b16 %v1213, %v1211
        %v1268 = vpack.c.b16 %v1216, %v1214
        %v1269 = vpack.c.b16 %v1217, %v1215
        %v1270 = vpack.c.b16 %v1220, %v1218
        %v1271 = vpack.c.b16 %v1221, %v1219
        %v1272 = vpack.c.b16 %v1224, %v1222
        %v1273 = vpack.c.b16 %v1225, %v1223
        %v1274 = vpack.c.b16 %v1228, %v1226
        %v1275 = vpack.c.b16 %v1229, %v1227
        %v1276 = vpack.c.b16 %v1232, %v1230
        %v1277 = vpack.c.b16 %v1233, %v1231
        %v1278 = vpack.c.b16 %v1236, %v1234
        %v1279 = vpack.c.b16 %v1237, %v1235
        %v1280 = vpack.c.b16 %v1240, %v1238
        %v1281 = vpack.c.b16 %v1241, %v1239
        %v1282 = vpack.c.b16 %v1244, %v1242
        %v1283 = vpack.c.b16 %v1245, %v1243
        %v1284 = vpack.c.b16 %v1248, %v1246
        %v1285 = vpack.c.b16 %v1249, %v1247
        %v1286 = vpack.c.b16 %v1252, %v1250
        %v1287 = vpack.c.b16 %v1253, %v1251
        %v1288 = vpack.c.b16 %v1256, %v1254
        %v1289 = vpack.c.b16 %v1257, %v1255
        %1322 = vmatprep.subr.bf16.mxu0 %v1273
        %1323 = vmatpush1.bf16.msra.mxu0 %v1272
        %1324 = vmatprep.subr.bf16.mxu0 %v1271
        %1325 = vmatpush1.bf16.msra.mxu0 %v1270
        %1326 = vmatprep.subr.bf16.mxu0 %v1269
        %1327 = vmatpush1.bf16.msra.mxu0 %v1268
        %1328 = vmatprep.subr.bf16.mxu0 %v1267
        %1329 = vmatpush1.bf16.msra.mxu0 %v1266
        %1330 = vmatprep.subr.bf16.mxu0 %v1265
        %1331 = vmatpush1.bf16.msra.mxu0 %v1264
        %1332 = vmatprep.subr.bf16.mxu0 %v1263
        %1333 = vmatpush1.bf16.msra.mxu0 %v1262
        %1334 = vmatprep.subr.bf16.mxu0 %v1261
        %1335 = vmatpush1.bf16.msra.mxu0 %v1260
        %1336 = vmatprep.subr.bf16.mxu0 %v1259
        %1337 = vmatpush1.bf16.msra.mxu0 %v1258
        %1338 = vmatprep.subr.bf16.mxu0 %v1289
        %1339 = vmatpush2.bf16.msra.mxu0 %v1288
        %1340 = vmatprep.subr.bf16.mxu0 %v1287
        %1341 = vmatpush2.bf16.msra.mxu0 %v1286
        %1342 = vmatprep.subr.bf16.mxu0 %v1285
        %1343 = vmatpush2.bf16.msra.mxu0 %v1284
        %1344 = vmatprep.subr.bf16.mxu0 %v1283
        %1345 = vmatpush2.bf16.msra.mxu0 %v1282
        %1346 = vmatprep.subr.bf16.mxu0 %v1281
        %1347 = vmatpush2.bf16.msra.mxu0 %v1280
        %1348 = vmatprep.subr.bf16.mxu0 %v1279
        %1349 = vmatpush2.bf16.msra.mxu0 %v1278
        %1350 = vmatprep.subr.bf16.mxu0 %v1277
        %1351 = vmatpush2.bf16.msra.mxu0 %v1276
        %1352 = vmatprep.subr.bf16.mxu0 %v1275
        %1353 = vmatpush2.bf16.msra.mxu0 %v1274
        %1354 = vmatprep.mubr.bf16.mxu0 %v1155
        %1355 = vmatmul.mubr.bf16.gmra.mxu0 %v1154
        %v1356 = vpop.f32.mrf.mxu0
        %v1357 = vadd.f32 0.0, %v1356
        %v1358 = vpop.f32.mrf.mxu0
        %v1359 = vadd.f32 0.0, %v1358
        %v1360 = vpop.f32.mrf.mxu0
        %v1361 = vadd.f32 0.0, %v1360
        %v1362 = vpop.f32.mrf.mxu0
        %v1363 = vadd.f32 0.0, %v1362
        %1364 = vmatprep.mubr.bf16.mxu0 %v1157
        %1365 = vmatmul.mubr.bf16.gmra.mxu0 %v1156
        %v1366 = vpop.f32.mrf.mxu0
        %v1367 = vadd.f32 0.0, %v1366
        %v1368 = vpop.f32.mrf.mxu0
        %v1369 = vadd.f32 0.0, %v1368
        %v1370 = vpop.f32.mrf.mxu0
        %v1371 = vadd.f32 0.0, %v1370
        %v1372 = vpop.f32.mrf.mxu0
        %v1373 = vadd.f32 0.0, %v1372
        %1374 = vdwg.mxu0
        %v1379 = vunpack.c.l.b16 %v1086
        %v1380 = vunpack.c.l.b16 %v1087
        %v1381 = vunpack.c.l.b16 %v1088
        %v1382 = vunpack.c.l.b16 %v1089
        %v1383 = vpack.c.b16 %v1380, %v1379
        %v1384 = vpack.c.b16 %v1382, %v1381
        %v1403 = vunpack.c.l.b16 %v1090
        %v1404 = vunpack.c.h.b16 %v1090
        %v1405 = vunpack.c.l.b16 %v1091
        %v1406 = vunpack.c.h.b16 %v1091
        %v1407 = vunpack.c.l.b16 %v1092
        %v1408 = vunpack.c.h.b16 %v1092
        %v1409 = vunpack.c.l.b16 %v1093
        %v1410 = vunpack.c.h.b16 %v1093
        %v1411 = vunpack.c.l.b16 %v1094
        %v1412 = vunpack.c.h.b16 %v1094
        %v1413 = vunpack.c.l.b16 %v1095
        %v1414 = vunpack.c.h.b16 %v1095
        %v1415 = vunpack.c.l.b16 %v1096
        %v1416 = vunpack.c.h.b16 %v1096
        %v1417 = vunpack.c.l.b16 %v1097
        %v1418 = vunpack.c.h.b16 %v1097
        %v1419 = vunpack.c.l.b16 %v1098
        %v1420 = vunpack.c.h.b16 %v1098
        %v1421 = vunpack.c.l.b16 %v1099
        %v1422 = vunpack.c.h.b16 %v1099
        %v1423 = vunpack.c.l.b16 %v1100
        %v1424 = vunpack.c.h.b16 %v1100
        %v1425 = vunpack.c.l.b16 %v1101
        %v1426 = vunpack.c.h.b16 %v1101
        %v1427 = vunpack.c.l.b16 %v1102
        %v1428 = vunpack.c.h.b16 %v1102
        %v1429 = vunpack.c.l.b16 %v1103
        %v1430 = vunpack.c.h.b16 %v1103
        %v1431 = vunpack.c.l.b16 %v1104
        %v1432 = vunpack.c.h.b16 %v1104
        %v1433 = vunpack.c.l.b16 %v1105
        %v1434 = vunpack.c.h.b16 %v1105
        %v1435 = vpack.c.b16 %v1405, %v1403
        %v1436 = vpack.c.b16 %v1406, %v1404
        %v1437 = vpack.c.b16 %v1409, %v1407
        %v1438 = vpack.c.b16 %v1410, %v1408
        %v1439 = vpack.c.b16 %v1413, %v1411
        %v1440 = vpack.c.b16 %v1414, %v1412
        %v1441 = vpack.c.b16 %v1417, %v1415
        %v1442 = vpack.c.b16 %v1418, %v1416
        %v1443 = vpack.c.b16 %v1421, %v1419
        %v1444 = vpack.c.b16 %v1422, %v1420
        %v1445 = vpack.c.b16 %v1425, %v1423
        %v1446 = vpack.c.b16 %v1426, %v1424
        %v1447 = vpack.c.b16 %v1429, %v1427
        %v1448 = vpack.c.b16 %v1430, %v1428
        %v1449 = vpack.c.b16 %v1433, %v1431
        %v1450 = vpack.c.b16 %v1434, %v1432
        %1467 = vmatprep.subr.bf16.mxu0 %v1450
        %1468 = vmatpush1.bf16.msra.mxu0 %v1449
        %1469 = vmatprep.subr.bf16.mxu0 %v1448
        %1470 = vmatpush1.bf16.msra.mxu0 %v1447
        %1471 = vmatprep.subr.bf16.mxu0 %v1446
        %1472 = vmatpush1.bf16.msra.mxu0 %v1445
        %1473 = vmatprep.subr.bf16.mxu0 %v1444
        %1474 = vmatpush1.bf16.msra.mxu0 %v1443
        %1475 = vmatprep.subr.bf16.mxu0 %v1442
        %1476 = vmatpush1.bf16.msra.mxu0 %v1441
        %1477 = vmatprep.subr.bf16.mxu0 %v1440
        %1478 = vmatpush1.bf16.msra.mxu0 %v1439
        %1479 = vmatprep.subr.bf16.mxu0 %v1438
        %1480 = vmatpush1.bf16.msra.mxu0 %v1437
        %1481 = vmatprep.subr.bf16.mxu0 %v1436
        %1482 = vmatpush1.bf16.msra.mxu0 %v1435
        %1483 = vmatprep.subr.bf16.mxu0 0
        %1484 = vmatpush2.bf16.msra.mxu0 0
        %1485 = vmatprep.subr.bf16.mxu0 0
        %1486 = vmatpush2.bf16.msra.mxu0 0
        %1487 = vmatprep.subr.bf16.mxu0 0
        %1488 = vmatpush2.bf16.msra.mxu0 0
        %1489 = vmatprep.subr.bf16.mxu0 0
        %1490 = vmatpush2.bf16.msra.mxu0 0
        %1491 = vmatprep.subr.bf16.mxu0 0
        %1492 = vmatpush2.bf16.msra.mxu0 0
        %1493 = vmatprep.subr.bf16.mxu0 0
        %1494 = vmatpush2.bf16.msra.mxu0 0
        %1495 = vmatprep.subr.bf16.mxu0 0
        %1496 = vmatpush2.bf16.msra.mxu0 0
        %1497 = vmatprep.subr.bf16.mxu0 0
        %1498 = vmatpush2.bf16.msra.mxu0 0
        %1499 = vmatprep.mubr.bf16.mxu0 0
        %1500 = vmatmul.mubr.bf16.gmra.mxu0 %v1383
        %v1501 = vpop.f32.mrf.mxu0
        %v1502 = vadd.f32 %v1357, %v1501
        %v1503 = vpop.f32.mrf.mxu0
        %v1504 = vadd.f32 %v1359, %v1503
        %v1505 = vpop.f32.mrf.mxu0
        %v1506 = vadd.f32 %v1361, %v1505
        %v1507 = vpop.f32.mrf.mxu0
        %v1508 = vadd.f32 %v1363, %v1507
        %1509 = vmatprep.mubr.bf16.mxu0 0
        %1510 = vmatmul.mubr.bf16.gmra.mxu0 %v1384
        %v1511 = vpop.f32.mrf.mxu0
        %v1512 = vadd.f32 %v1367, %v1511
        %v1513 = vpop.f32.mrf.mxu0
        %v1514 = vadd.f32 %v1369, %v1513
        %v1515 = vpop.f32.mrf.mxu0
        %v1516 = vadd.f32 %v1371, %v1515
        %v1517 = vpop.f32.mrf.mxu0
        %v1518 = vadd.f32 %v1373, %v1517
        %1519 = vdwg.mxu0
        %v1520 = vld [vmem:[#allocation3] sm:$0xff]
        %v1521 = vld [vmem:[#allocation3 + $0x8] sm:$0xff]
        %v1522 = vld [vmem:[#allocation3 + $0x10] sm:$0x11]
        %v1523 = vld [vmem:[#allocation3 + $0x18] sm:$0xff]
        %v1524 = vld [vmem:[#allocation3 + $0x20] sm:$0xff]
        %v1525 = vld [vmem:[#allocation3 + $0x28] sm:$0x11]
        %v1527 = vshrl.u32 %v1520, 16
        %v1529 = vrot.slane %v1527, 4
        %v1530 = vshll.u32 %v1520, 16
        %v1532 = vrot.slane %v1530, 5
        %v1533 = vor.u32 %v1529, %v1532
        %v1534 = vrot.slane %v1533, 4
        %v1536 = vshll.u32 %v1521, 16
        %v1538 = vrot.slane %v1536, 5
        %v1539 = vsel %vm440, %v1534, %v1538
        %v1540 = vshrl.u32 %v1521, 16
        %v1542 = vrot.slane %v1540, 4
        %v1543 = vor.u32 %v1542, %v1538
        %v1544 = vrot.slane %v1543, 4
        %v1546 = vshll.u32 %v1522, 16
        %v1548 = vrot.slane %v1546, 5
        %v1549 = vsel %vm440, %v1544, %v1548
        %v1551 = vshrl.u32 %v1523, 16
        %v1553 = vrot.slane %v1551, 4
        %v1554 = vshll.u32 %v1523, 16
        %v1556 = vrot.slane %v1554, 5
        %v1557 = vor.u32 %v1553, %v1556
        %v1558 = vrot.slane %v1557, 4
        %v1560 = vshll.u32 %v1524, 16
        %v1562 = vrot.slane %v1560, 5
        %v1563 = vsel %vm440, %v1558, %v1562
        %v1564 = vshrl.u32 %v1524, 16
        %v1566 = vrot.slane %v1564, 4
        %v1567 = vor.u32 %v1566, %v1562
        %v1568 = vrot.slane %v1567, 4
        %v1570 = vshll.u32 %v1525, 16
        %v1572 = vrot.slane %v1570, 5
        %v1573 = vsel %vm440, %v1568, %v1572
        %s1574 = scalar_lea.vmem [#allocation9], 256
        %v1575 = vld [vmem:[%s1574] sm:$0xff]
        %v1576 = vld [vmem:[%s1574 + $0x8] sm:$0xff]
        %v1577 = vld [vmem:[%s1574 + $0x10] sm:$0xff]
        %v1578 = vld [vmem:[%s1574 + $0x18] sm:$0xff]
        %v1579 = vld [vmem:[%s1574 + $0x20] sm:$0xff]
        %v1580 = vld [vmem:[%s1574 + $0x28] sm:$0xff]
        %v1581 = vld [vmem:[%s1574 + $0x30] sm:$0xff]
        %v1582 = vld [vmem:[%s1574 + $0x38] sm:$0xff]
        %v1583 = vld [vmem:[%s1574 + $0x40] sm:$0xff]
        %v1584 = vld [vmem:[%s1574 + $0x48] sm:$0xff]
        %v1585 = vld [vmem:[%s1574 + $0x50] sm:$0xff]
        %v1586 = vld [vmem:[%s1574 + $0x58] sm:$0xff]
        %v1587 = vld [vmem:[%s1574 + $0x60] sm:$0xff]
        %v1588 = vld [vmem:[%s1574 + $0x68] sm:$0xff]
        %v1589 = vld [vmem:[%s1574 + $0x70] sm:$0xff]
        %v1590 = vld [vmem:[%s1574 + $0x78] sm:$0xff]
        %v1591 = vld [vmem:[%s1574 + $0x80] sm:$0xff]
        %v1592 = vld [vmem:[%s1574 + $0x88] sm:$0xff]
        %v1593 = vld [vmem:[%s1574 + $0x90] sm:$0xff]
        %v1594 = vld [vmem:[%s1574 + $0x98] sm:$0xff]
        %v1595 = vld [vmem:[%s1574 + $0xa0] sm:$0xff]
        %v1596 = vld [vmem:[%s1574 + $0xa8] sm:$0xff]
        %v1597 = vld [vmem:[%s1574 + $0xb0] sm:$0xff]
        %v1598 = vld [vmem:[%s1574 + $0xb8] sm:$0xff]
        %v1599 = vld [vmem:[%s1574 + $0xc0] sm:$0xff]
        %v1600 = vld [vmem:[%s1574 + $0xc8] sm:$0xff]
        %v1601 = vld [vmem:[%s1574 + $0xd0] sm:$0xff]
        %v1602 = vld [vmem:[%s1574 + $0xd8] sm:$0xff]
        %v1603 = vld [vmem:[%s1574 + $0xe0] sm:$0xff]
        %v1604 = vld [vmem:[%s1574 + $0xe8] sm:$0xff]
        %v1605 = vld [vmem:[%s1574 + $0xf0] sm:$0xff]
        %v1606 = vld [vmem:[%s1574 + $0xf8] sm:$0xff]
        %v1607 = vunpack.c.l.b16 %v1539
        %v1608 = vunpack.c.h.b16 %v1539
        %v1609 = vunpack.c.l.b16 %v1549
        %v1610 = vunpack.c.h.b16 %v1549
        %v1611 = vunpack.c.l.b16 %v1563
        %v1612 = vunpack.c.h.b16 %v1563
        %v1613 = vunpack.c.l.b16 %v1573
        %v1614 = vunpack.c.h.b16 %v1573
        %v1615 = vpack.c.b16 %v1609, %v1607
        %v1616 = vpack.c.b16 %v1610, %v1608
        %v1617 = vpack.c.b16 %v1613, %v1611
        %v1618 = vpack.c.b16 %v1614, %v1612
        %v1655 = vunpack.c.l.b16 %v1575
        %v1656 = vunpack.c.h.b16 %v1575
        %v1657 = vunpack.c.l.b16 %v1576
        %v1658 = vunpack.c.h.b16 %v1576
        %v1659 = vunpack.c.l.b16 %v1577
        %v1660 = vunpack.c.h.b16 %v1577
        %v1661 = vunpack.c.l.b16 %v1578
        %v1662 = vunpack.c.h.b16 %v1578
        %v1663 = vunpack.c.l.b16 %v1579
        %v1664 = vunpack.c.h.b16 %v1579
        %v1665 = vunpack.c.l.b16 %v1580
        %v1666 = vunpack.c.h.b16 %v1580
        %v1667 = vunpack.c.l.b16 %v1581
        %v1668 = vunpack.c.h.b16 %v1581
        %v1669 = vunpack.c.l.b16 %v1582
        %v1670 = vunpack.c.h.b16 %v1582
        %v1671 = vunpack.c.l.b16 %v1583
        %v1672 = vunpack.c.h.b16 %v1583
        %v1673 = vunpack.c.l.b16 %v1584
        %v1674 = vunpack.c.h.b16 %v1584
        %v1675 = vunpack.c.l.b16 %v1585
        %v1676 = vunpack.c.h.b16 %v1585
        %v1677 = vunpack.c.l.b16 %v1586
        %v1678 = vunpack.c.h.b16 %v1586
        %v1679 = vunpack.c.l.b16 %v1587
        %v1680 = vunpack.c.h.b16 %v1587
        %v1681 = vunpack.c.l.b16 %v1588
        %v1682 = vunpack.c.h.b16 %v1588
        %v1683 = vunpack.c.l.b16 %v1589
        %v1684 = vunpack.c.h.b16 %v1589
        %v1685 = vunpack.c.l.b16 %v1590
        %v1686 = vunpack.c.h.b16 %v1590
        %v1687 = vunpack.c.l.b16 %v1591
        %v1688 = vunpack.c.h.b16 %v1591
        %v1689 = vunpack.c.l.b16 %v1592
        %v1690 = vunpack.c.h.b16 %v1592
        %v1691 = vunpack.c.l.b16 %v1593
        %v1692 = vunpack.c.h.b16 %v1593
        %v1693 = vunpack.c.l.b16 %v1594
        %v1694 = vunpack.c.h.b16 %v1594
        %v1695 = vunpack.c.l.b16 %v1595
        %v1696 = vunpack.c.h.b16 %v1595
        %v1697 = vunpack.c.l.b16 %v1596
        %v1698 = vunpack.c.h.b16 %v1596
        %v1699 = vunpack.c.l.b16 %v1597
        %v1700 = vunpack.c.h.b16 %v1597
        %v1701 = vunpack.c.l.b16 %v1598
        %v1702 = vunpack.c.h.b16 %v1598
        %v1703 = vunpack.c.l.b16 %v1599
        %v1704 = vunpack.c.h.b16 %v1599
        %v1705 = vunpack.c.l.b16 %v1600
        %v1706 = vunpack.c.h.b16 %v1600
        %v1707 = vunpack.c.l.b16 %v1601
        %v1708 = vunpack.c.h.b16 %v1601
        %v1709 = vunpack.c.l.b16 %v1602
        %v1710 = vunpack.c.h.b16 %v1602
        %v1711 = vunpack.c.l.b16 %v1603
        %v1712 = vunpack.c.h.b16 %v1603
        %v1713 = vunpack.c.l.b16 %v1604
        %v1714 = vunpack.c.h.b16 %v1604
        %v1715 = vunpack.c.l.b16 %v1605
        %v1716 = vunpack.c.h.b16 %v1605
        %v1717 = vunpack.c.l.b16 %v1606
        %v1718 = vunpack.c.h.b16 %v1606
        %v1719 = vpack.c.b16 %v1657, %v1655
        %v1720 = vpack.c.b16 %v1658, %v1656
        %v1721 = vpack.c.b16 %v1661, %v1659
        %v1722 = vpack.c.b16 %v1662, %v1660
        %v1723 = vpack.c.b16 %v1665, %v1663
        %v1724 = vpack.c.b16 %v1666, %v1664
        %v1725 = vpack.c.b16 %v1669, %v1667
        %v1726 = vpack.c.b16 %v1670, %v1668
        %v1727 = vpack.c.b16 %v1673, %v1671
        %v1728 = vpack.c.b16 %v1674, %v1672
        %v1729 = vpack.c.b16 %v1677, %v1675
        %v1730 = vpack.c.b16 %v1678, %v1676
        %v1731 = vpack.c.b16 %v1681, %v1679
        %v1732 = vpack.c.b16 %v1682, %v1680
        %v1733 = vpack.c.b16 %v1685, %v1683
        %v1734 = vpack.c.b16 %v1686, %v1684
        %v1735 = vpack.c.b16 %v1689, %v1687
        %v1736 = vpack.c.b16 %v1690, %v1688
        %v1737 = vpack.c.b16 %v1693, %v1691
        %v1738 = vpack.c.b16 %v1694, %v1692
        %v1739 = vpack.c.b16 %v1697, %v1695
        %v1740 = vpack.c.b16 %v1698, %v1696
        %v1741 = vpack.c.b16 %v1701, %v1699
        %v1742 = vpack.c.b16 %v1702, %v1700
        %v1743 = vpack.c.b16 %v1705, %v1703
        %v1744 = vpack.c.b16 %v1706, %v1704
        %v1745 = vpack.c.b16 %v1709, %v1707
        %v1746 = vpack.c.b16 %v1710, %v1708
        %v1747 = vpack.c.b16 %v1713, %v1711
        %v1748 = vpack.c.b16 %v1714, %v1712
        %v1749 = vpack.c.b16 %v1717, %v1715
        %v1750 = vpack.c.b16 %v1718, %v1716
        %1783 = vmatprep.subr.bf16.mxu0 %v1734
        %1784 = vmatpush1.bf16.msra.mxu0 %v1733
        %1785 = vmatprep.subr.bf16.mxu0 %v1732
        %1786 = vmatpush1.bf16.msra.mxu0 %v1731
        %1787 = vmatprep.subr.bf16.mxu0 %v1730
        %1788 = vmatpush1.bf16.msra.mxu0 %v1729
        %1789 = vmatprep.subr.bf16.mxu0 %v1728
        %1790 = vmatpush1.bf16.msra.mxu0 %v1727
        %1791 = vmatprep.subr.bf16.mxu0 %v1726
        %1792 = vmatpush1.bf16.msra.mxu0 %v1725
        %1793 = vmatprep.subr.bf16.mxu0 %v1724
        %1794 = vmatpush1.bf16.msra.mxu0 %v1723
        %1795 = vmatprep.subr.bf16.mxu0 %v1722
        %1796 = vmatpush1.bf16.msra.mxu0 %v1721
        %1797 = vmatprep.subr.bf16.mxu0 %v1720
        %1798 = vmatpush1.bf16.msra.mxu0 %v1719
        %1799 = vmatprep.subr.bf16.mxu0 %v1750
        %1800 = vmatpush2.bf16.msra.mxu0 %v1749
        %1801 = vmatprep.subr.bf16.mxu0 %v1748
        %1802 = vmatpush2.bf16.msra.mxu0 %v1747
        %1803 = vmatprep.subr.bf16.mxu0 %v1746
        %1804 = vmatpush2.bf16.msra.mxu0 %v1745
        %1805 = vmatprep.subr.bf16.mxu0 %v1744
        %1806 = vmatpush2.bf16.msra.mxu0 %v1743
        %1807 = vmatprep.subr.bf16.mxu0 %v1742
        %1808 = vmatpush2.bf16.msra.mxu0 %v1741
        %1809 = vmatprep.subr.bf16.mxu0 %v1740
        %1810 = vmatpush2.bf16.msra.mxu0 %v1739
        %1811 = vmatprep.subr.bf16.mxu0 %v1738
        %1812 = vmatpush2.bf16.msra.mxu0 %v1737
        %1813 = vmatprep.subr.bf16.mxu0 %v1736
        %1814 = vmatpush2.bf16.msra.mxu0 %v1735
        %1815 = vmatprep.mubr.bf16.mxu0 %v1616
        %1816 = vmatmul.mubr.bf16.gmra.mxu0 %v1615
        %v1817 = vpop.f32.mrf.mxu0
        %v1818 = vadd.f32 0.0, %v1817
        %v1819 = vpop.f32.mrf.mxu0
        %v1820 = vadd.f32 0.0, %v1819
        %v1821 = vpop.f32.mrf.mxu0
        %v1822 = vadd.f32 0.0, %v1821
        %v1823 = vpop.f32.mrf.mxu0
        %v1824 = vadd.f32 0.0, %v1823
        %1825 = vmatprep.mubr.bf16.mxu0 %v1618
        %1826 = vmatmul.mubr.bf16.gmra.mxu0 %v1617
        %v1827 = vpop.f32.mrf.mxu0
        %v1828 = vadd.f32 0.0, %v1827
        %v1829 = vpop.f32.mrf.mxu0
        %v1830 = vadd.f32 0.0, %v1829
        %v1831 = vpop.f32.mrf.mxu0
        %v1832 = vadd.f32 0.0, %v1831
        %v1833 = vpop.f32.mrf.mxu0
        %v1834 = vadd.f32 0.0, %v1833
        %1835 = vdwg.mxu0
        %v1836 = vadd.f32 %v1502, %v1818
        %v1837 = vadd.f32 %v1504, %v1820
        %v1838 = vadd.f32 %v1506, %v1822
        %v1839 = vadd.f32 %v1508, %v1824
        %v1840 = vadd.f32 %v1512, %v1828
        %v1841 = vadd.f32 %v1514, %v1830
        %v1842 = vadd.f32 %v1516, %v1832
        %v1843 = vadd.f32 %v1518, %v1834
        %v1844 = vld [vmem:[#allocation3] sm:$0xee]
        %v1845 = vld [vmem:[#allocation3 + $0x18] sm:$0xee]
        %v1852 = vrot.slane %v1844, 5
        %v1853 = vrot.slane %v1852, 4
        %v1854 = vrot.slane %v1521, 5
        %v1855 = vsel %vm800, %v1853, %v1854
        %v1856 = vrot.slane %v1854, 4
        %v1857 = vrot.slane %v1522, 5
        %v1858 = vsel %vm800, %v1856, %v1857
        %v1859 = vrot.slane %v1845, 5
        %v1860 = vrot.slane %v1859, 4
        %v1861 = vrot.slane %v1524, 5
        %v1862 = vsel %vm800, %v1860, %v1861
        %v1863 = vrot.slane %v1861, 4
        %v1864 = vrot.slane %v1525, 5
        %v1865 = vsel %vm800, %v1863, %v1864
        %s1866 = scalar_lea.vmem [#allocation9], 512
        %v1867 = vld [vmem:[%s1866] sm:$0xff]
        %v1868 = vld [vmem:[%s1866 + $0x8] sm:$0xff]
        %v1869 = vld [vmem:[%s1866 + $0x10] sm:$0xff]
        %v1870 = vld [vmem:[%s1866 + $0x18] sm:$0xff]
        %v1871 = vld [vmem:[%s1866 + $0x20] sm:$0xff]
        %v1872 = vld [vmem:[%s1866 + $0x28] sm:$0xff]
        %v1873 = vld [vmem:[%s1866 + $0x30] sm:$0xff]
        %v1874 = vld [vmem:[%s1866 + $0x38] sm:$0xff]
        %v1875 = vld [vmem:[%s1866 + $0x40] sm:$0xff]
        %v1876 = vld [vmem:[%s1866 + $0x48] sm:$0xff]
        %v1877 = vld [vmem:[%s1866 + $0x50] sm:$0xff]
        %v1878 = vld [vmem:[%s1866 + $0x58] sm:$0xff]
        %v1879 = vld [vmem:[%s1866 + $0x60] sm:$0xff]
        %v1880 = vld [vmem:[%s1866 + $0x68] sm:$0xff]
        %v1881 = vld [vmem:[%s1866 + $0x70] sm:$0xff]
        %v1882 = vld [vmem:[%s1866 + $0x78] sm:$0xff]
        %v1883 = vld [vmem:[%s1866 + $0x80] sm:$0xff]
        %v1884 = vld [vmem:[%s1866 + $0x88] sm:$0xff]
        %v1885 = vld [vmem:[%s1866 + $0x90] sm:$0xff]
        %v1886 = vld [vmem:[%s1866 + $0x98] sm:$0xff]
        %v1887 = vld [vmem:[%s1866 + $0xa0] sm:$0xff]
        %v1888 = vld [vmem:[%s1866 + $0xa8] sm:$0xff]
        %v1889 = vld [vmem:[%s1866 + $0xb0] sm:$0xff]
        %v1890 = vld [vmem:[%s1866 + $0xb8] sm:$0xff]
        %v1891 = vld [vmem:[%s1866 + $0xc0] sm:$0xff]
        %v1892 = vld [vmem:[%s1866 + $0xc8] sm:$0xff]
        %v1893 = vld [vmem:[%s1866 + $0xd0] sm:$0xff]
        %v1894 = vld [vmem:[%s1866 + $0xd8] sm:$0xff]
        %v1895 = vld [vmem:[%s1866 + $0xe0] sm:$0xff]
        %v1896 = vld [vmem:[%s1866 + $0xe8] sm:$0xff]
        %v1897 = vld [vmem:[%s1866 + $0xf0] sm:$0xff]
        %v1898 = vld [vmem:[%s1866 + $0xf8] sm:$0xff]
        %v1899 = vunpack.c.l.b16 %v1855
        %v1900 = vunpack.c.h.b16 %v1855
        %v1901 = vunpack.c.l.b16 %v1858
        %v1902 = vunpack.c.h.b16 %v1858
        %v1903 = vunpack.c.l.b16 %v1862
        %v1904 = vunpack.c.h.b16 %v1862
        %v1905 = vunpack.c.l.b16 %v1865
        %v1906 = vunpack.c.h.b16 %v1865
        %v1907 = vpack.c.b16 %v1901, %v1899
        %v1908 = vpack.c.b16 %v1902, %v1900
        %v1909 = vpack.c.b16 %v1905, %v1903
        %v1910 = vpack.c.b16 %v1906, %v1904
        %v1947 = vunpack.c.l.b16 %v1867
        %v1948 = vunpack.c.h.b16 %v1867
        %v1949 = vunpack.c.l.b16 %v1868
        %v1950 = vunpack.c.h.b16 %v1868
        %v1951 = vunpack.c.l.b16 %v1869
        %v1952 = vunpack.c.h.b16 %v1869
        %v1953 = vunpack.c.l.b16 %v1870
        %v1954 = vunpack.c.h.b16 %v1870
        %v1955 = vunpack.c.l.b16 %v1871
        %v1956 = vunpack.c.h.b16 %v1871
        %v1957 = vunpack.c.l.b16 %v1872
        %v1958 = vunpack.c.h.b16 %v1872
        %v1959 = vunpack.c.l.b16 %v1873
        %v1960 = vunpack.c.h.b16 %v1873
        %v1961 = vunpack.c.l.b16 %v1874
        %v1962 = vunpack.c.h.b16 %v1874
        %v1963 = vunpack.c.l.b16 %v1875
        %v1964 = vunpack.c.h.b16 %v1875
        %v1965 = vunpack.c.l.b16 %v1876
        %v1966 = vunpack.c.h.b16 %v1876
        %v1967 = vunpack.c.l.b16 %v1877
        %v1968 = vunpack.c.h.b16 %v1877
        %v1969 = vunpack.c.l.b16 %v1878
        %v1970 = vunpack.c.h.b16 %v1878
        %v1971 = vunpack.c.l.b16 %v1879
        %v1972 = vunpack.c.h.b16 %v1879
        %v1973 = vunpack.c.l.b16 %v1880
        %v1974 = vunpack.c.h.b16 %v1880
        %v1975 = vunpack.c.l.b16 %v1881
        %v1976 = vunpack.c.h.b16 %v1881
        %v1977 = vunpack.c.l.b16 %v1882
        %v1978 = vunpack.c.h.b16 %v1882
        %v1979 = vunpack.c.l.b16 %v1883
        %v1980 = vunpack.c.h.b16 %v1883
        %v1981 = vunpack.c.l.b16 %v1884
        %v1982 = vunpack.c.h.b16 %v1884
        %v1983 = vunpack.c.l.b16 %v1885
        %v1984 = vunpack.c.h.b16 %v1885
        %v1985 = vunpack.c.l.b16 %v1886
        %v1986 = vunpack.c.h.b16 %v1886
        %v1987 = vunpack.c.l.b16 %v1887
        %v1988 = vunpack.c.h.b16 %v1887
        %v1989 = vunpack.c.l.b16 %v1888
        %v1990 = vunpack.c.h.b16 %v1888
        %v1991 = vunpack.c.l.b16 %v1889
        %v1992 = vunpack.c.h.b16 %v1889
        %v1993 = vunpack.c.l.b16 %v1890
        %v1994 = vunpack.c.h.b16 %v1890
        %v1995 = vunpack.c.l.b16 %v1891
        %v1996 = vunpack.c.h.b16 %v1891
        %v1997 = vunpack.c.l.b16 %v1892
        %v1998 = vunpack.c.h.b16 %v1892
        %v1999 = vunpack.c.l.b16 %v1893
        %v2000 = vunpack.c.h.b16 %v1893
        %v2001 = vunpack.c.l.b16 %v1894
        %v2002 = vunpack.c.h.b16 %v1894
        %v2003 = vunpack.c.l.b16 %v1895
        %v2004 = vunpack.c.h.b16 %v1895
        %v2005 = vunpack.c.l.b16 %v1896
        %v2006 = vunpack.c.h.b16 %v1896
        %v2007 = vunpack.c.l.b16 %v1897
        %v2008 = vunpack.c.h.b16 %v1897
        %v2009 = vunpack.c.l.b16 %v1898
        %v2010 = vunpack.c.h.b16 %v1898
        %v2011 = vpack.c.b16 %v1949, %v1947
        %v2012 = vpack.c.b16 %v1950, %v1948
        %v2013 = vpack.c.b16 %v1953, %v1951
        %v2014 = vpack.c.b16 %v1954, %v1952
        %v2015 = vpack.c.b16 %v1957, %v1955
        %v2016 = vpack.c.b16 %v1958, %v1956
        %v2017 = vpack.c.b16 %v1961, %v1959
        %v2018 = vpack.c.b16 %v1962, %v1960
        %v2019 = vpack.c.b16 %v1965, %v1963
        %v2020 = vpack.c.b16 %v1966, %v1964
        %v2021 = vpack.c.b16 %v1969, %v1967
        %v2022 = vpack.c.b16 %v1970, %v1968
        %v2023 = vpack.c.b16 %v1973, %v1971
        %v2024 = vpack.c.b16 %v1974, %v1972
        %v2025 = vpack.c.b16 %v1977, %v1975
        %v2026 = vpack.c.b16 %v1978, %v1976
        %v2027 = vpack.c.b16 %v1981, %v1979
        %v2028 = vpack.c.b16 %v1982, %v1980
        %v2029 = vpack.c.b16 %v1985, %v1983
        %v2030 = vpack.c.b16 %v1986, %v1984
        %v2031 = vpack.c.b16 %v1989, %v1987
        %v2032 = vpack.c.b16 %v1990, %v1988
        %v2033 = vpack.c.b16 %v1993, %v1991
        %v2034 = vpack.c.b16 %v1994, %v1992
        %v2035 = vpack.c.b16 %v1997, %v1995
        %v2036 = vpack.c.b16 %v1998, %v1996
        %v2037 = vpack.c.b16 %v2001, %v1999
        %v2038 = vpack.c.b16 %v2002, %v2000
        %v2039 = vpack.c.b16 %v2005, %v2003
        %v2040 = vpack.c.b16 %v2006, %v2004
        %v2041 = vpack.c.b16 %v2009, %v2007
        %v2042 = vpack.c.b16 %v2010, %v2008
        %2075 = vmatprep.subr.bf16.mxu0 %v2026
        %2076 = vmatpush1.bf16.msra.mxu0 %v2025
        %2077 = vmatprep.subr.bf16.mxu0 %v2024
        %2078 = vmatpush1.bf16.msra.mxu0 %v2023
        %2079 = vmatprep.subr.bf16.mxu0 %v2022
        %2080 = vmatpush1.bf16.msra.mxu0 %v2021
        %2081 = vmatprep.subr.bf16.mxu0 %v2020
        %2082 = vmatpush1.bf16.msra.mxu0 %v2019
        %2083 = vmatprep.subr.bf16.mxu0 %v2018
        %2084 = vmatpush1.bf16.msra.mxu0 %v2017
        %2085 = vmatprep.subr.bf16.mxu0 %v2016
        %2086 = vmatpush1.bf16.msra.mxu0 %v2015
        %2087 = vmatprep.subr.bf16.mxu0 %v2014
        %2088 = vmatpush1.bf16.msra.mxu0 %v2013
        %2089 = vmatprep.subr.bf16.mxu0 %v2012
        %2090 = vmatpush1.bf16.msra.mxu0 %v2011
        %2091 = vmatprep.subr.bf16.mxu0 %v2042
        %2092 = vmatpush2.bf16.msra.mxu0 %v2041
        %2093 = vmatprep.subr.bf16.mxu0 %v2040
        %2094 = vmatpush2.bf16.msra.mxu0 %v2039
        %2095 = vmatprep.subr.bf16.mxu0 %v2038
        %2096 = vmatpush2.bf16.msra.mxu0 %v2037
        %2097 = vmatprep.subr.bf16.mxu0 %v2036
        %2098 = vmatpush2.bf16.msra.mxu0 %v2035
        %2099 = vmatprep.subr.bf16.mxu0 %v2034
        %2100 = vmatpush2.bf16.msra.mxu0 %v2033
        %2101 = vmatprep.subr.bf16.mxu0 %v2032
        %2102 = vmatpush2.bf16.msra.mxu0 %v2031
        %2103 = vmatprep.subr.bf16.mxu0 %v2030
        %2104 = vmatpush2.bf16.msra.mxu0 %v2029
        %2105 = vmatprep.subr.bf16.mxu0 %v2028
        %2106 = vmatpush2.bf16.msra.mxu0 %v2027
        %2107 = vmatprep.mubr.bf16.mxu0 %v1908
        %2108 = vmatmul.mubr.bf16.gmra.mxu0 %v1907
        %v2109 = vpop.f32.mrf.mxu0
        %v2110 = vadd.f32 0.0, %v2109
        %v2111 = vpop.f32.mrf.mxu0
        %v2112 = vadd.f32 0.0, %v2111
        %v2113 = vpop.f32.mrf.mxu0
        %v2114 = vadd.f32 0.0, %v2113
        %v2115 = vpop.f32.mrf.mxu0
        %v2116 = vadd.f32 0.0, %v2115
        %2117 = vmatprep.mubr.bf16.mxu0 %v1910
        %2118 = vmatmul.mubr.bf16.gmra.mxu0 %v1909
        %v2119 = vpop.f32.mrf.mxu0
        %v2120 = vadd.f32 0.0, %v2119
        %v2121 = vpop.f32.mrf.mxu0
        %v2122 = vadd.f32 0.0, %v2121
        %v2123 = vpop.f32.mrf.mxu0
        %v2124 = vadd.f32 0.0, %v2123
        %v2125 = vpop.f32.mrf.mxu0
        %v2126 = vadd.f32 0.0, %v2125
        %2127 = vdwg.mxu0
        %v2128 = vadd.f32 %v1836, %v2110
        %v2129 = vadd.f32 %v1837, %v2112
        %v2130 = vadd.f32 %v1838, %v2114
        %v2131 = vadd.f32 %v1839, %v2116
        %v2132 = vadd.f32 %v1840, %v2120
        %v2133 = vadd.f32 %v1841, %v2122
        %v2134 = vadd.f32 %v1842, %v2124
        %v2135 = vadd.f32 %v1843, %v2126
        %v2136 = vld [vmem:[%s5] sm:$0x3]
        %v2138 = vlaneseq
        %v2139 = vshrl.u32 %v2138, 7
        %v2140 = vsub.s32 0, %v2139
        %v2141 = vrot.slane %v2136, %v2140
        %v2142 = vlaneseq
        %v2143 = vshrl.u32 %v2142, 7
        %v2144 = vsub.s32 1, %v2143
        %v2145 = vrot.slane %v2136, %v2144
        %v2148 = vadd.f32 %v2128, %v2141
        %v2149 = vadd.f32 %v2129, %v2145
        %v2150 = vadd.f32 %v2130, %v2141
        %v2151 = vadd.f32 %v2131, %v2145
        %v2152 = vadd.f32 %v2132, %v2141
        %v2153 = vadd.f32 %v2133, %v2145
        %v2154 = vadd.f32 %v2134, %v2141
        %v2155 = vadd.f32 %v2135, %v2145
        %v2156 = vmax.f32 %v2148, 0.0
        %v2157 = vmax.f32 %v2149, 0.0
        %v2158 = vmax.f32 %v2150, 0.0
        %v2159 = vmax.f32 %v2151, 0.0
        %v2160 = vmax.f32 %v2152, 0.0
        %v2161 = vmax.f32 %v2153, 0.0
        %v2162 = vmax.f32 %v2154, 0.0
        %v2163 = vmax.f32 %v2155, 0.0
        %2164 = vst [vmem:[%s314] sm:$0xff] %v2156
        %2165 = vst [vmem:[%s314 + $0x8] sm:$0xff] %v2157
        %2166 = vst [vmem:[%s314 + $0x10] sm:$0xff] %v2158
        %2167 = vst [vmem:[%s314 + $0x18] sm:$0xff] %v2159
        %2168 = vst [vmem:[%s314 + $0x20] sm:$0xff] %v2160
        %2169 = vst [vmem:[%s314 + $0x28] sm:$0xff] %v2161
        %2170 = vst [vmem:[%s314 + $0x30] sm:$0xff] %v2162
        %2171 = vst [vmem:[%s314 + $0x38] sm:$0xff] %v2163
        %s2172 = sand.u32 %s164, 1
        %s2173 = scalar_lea.sflag [#allocation6], %s2172
        %s2174 = sand.u32 %s164, 1
        %s2175 = smul.addr %s2174, 64
        %s2176 = scalar_lea.vmem [#allocation12], %s2175
        // Predicated region
        $region61: #{tpu_custom_call.1} parent=43 // pred_check
          %p2177 = pneg %p174
        $region62: #{tpu_custom_call.1} parent=43 // pred_check_branch
          %2179 = sbr.rel (%p2177) target = $region64
        $region63: #{tpu_custom_call.1} parent=43 // pred_region
          %s2180 = smul.u32 2, %s25
          %s2182 = ssub.s32 1024, 1024
          %2183 = vsyncadd %s2173, %s2182
          %s2184 = smul.addr %s2180, 4
          %s2185 = smul.addr %s2184, 128
          %s2186 = scalar_lea.hbm %s6, %s2185
          %s2187 = sshll.u32 %s2176, 4
          %s2188 = int_to_ptr.vmem [resolvable:$true] %s2187
          %2193 = dma.vmem_to_hbm [thread:$0]  %s2188, 1024, %s2186, %s2173, 256, 256, 16
        $region64: #{tpu_custom_call.1} parent=43 // pred_fallthru
          _
      $region44: #{tpu_custom_call.1} parent=5 // pred_fallthru
        _
      %p2194 = scmp.le.s32.totalorder 2, %s20
      // Predicated region
      $region65: #{tpu_custom_call.1} parent=5 // pred_check
        %p2195 = pneg %p2194
      $region66: #{tpu_custom_call.1} parent=5 // pred_check_branch
        %2197 = sbr.rel (%p2195) target = $region68
      $region67: #{tpu_custom_call.1} parent=5 // pred_region
        %s2198 = ssub.s32 %s20, 2
        // Predicated region
        $region69: #{tpu_custom_call.1} parent=67 // pred_check
          %p2199 = pneg %p180
        $region70: #{tpu_custom_call.1} parent=67 // pred_check_branch
          %2201 = sbr.rel (%p2199) target = $region72
        $region71: #{tpu_custom_call.1} parent=67 // pred_region
          %s2202 = sand.u32 %s165, 1
          %s2203 = scalar_lea.sflag [#allocation6], %s2202
          %s2204 = sand.u32 %s165, 1
          %s2205 = smul.addr %s2204, 64
          %s2206 = scalar_lea.vmem [#allocation12], %s2205
          %2207 = dma.done %s2203, 1024
        $region72: #{tpu_custom_call.1} parent=67 // pred_fallthru
          _
      $region68: #{tpu_custom_call.1} parent=5 // pred_fallthru
        _
    $region6: #{tpu_custom_call.1} parent=1 // loop_footer
      %s24 = sadd.s32 1, %s20
    $region7: #{tpu_custom_call.1} parent=1 // loop_footer_branch
      %19 = sbr.rel target = $region3
    $region8: #{tpu_custom_call.1} parent=1 // loop_exit
      _
    %2208 = vsyncpa [#allocation5], 1
    %s2209 = scalar_lea.sflag [#allocation5], 1
    %2210 = vsyncpa %s2209, 1
    %2211 = vsyncpa [#allocation8], 1
    %2212 = vsyncpa [#allocation11], 1
    %2213 = vsyncpa [#allocation6], 1
    %s2214 = scalar_lea.sflag [#allocation6], 1
    %2215 = vsyncpa %s2214, 1

</llo_original>
